<compile_context>
chip_gen: v6e
topology: v6e:2x2x1
jax: 0.10.0
libtpu: 0.0.40
codegen_flags: <defaults>
</compile_context>

<pallas_src>
import functools

import jax
import jax.numpy as jnp
from jax.experimental import pallas as pl
from jax.experimental.pallas import tpu as pltpu


def _bayes_lstm_kernel(x_ref, w_ih_ref, w_hh_ref, b_ref,
                       in_mask_ref, hid_mask_ref, out_mask_ref,
                       y_ref, h_out_ref, c_out_ref,
                       xproj_s, h_s, c_s,
                       *, matmul_dtype):
    # x_ref      : (T, B, In)   full input slab, time-major, VMEM-resident
    # w_ih_ref   : (In, 4H)     LSTMCell weight_ih, pre-transposed
    # w_hh_ref   : (H, 4H)      LSTMCell weight_hh, pre-transposed
    # b_ref      : (1, 4H)      bias_ih + bias_hh
    # *_mask_ref : (B, In)/(B, H)/(B, H) 0/1 dropout masks
    # y_ref      : (T, B, H)    output slab (time-major)
    # h_out_ref  : (B, H)       final (hidden-dropped) state
    # c_out_ref  : (B, H)       final cell state
    # xproj_s    : (T, B, 4H) f32  hoisted input projection
    # h_s, c_s   : (B, H) f32      recurrent state
    T, B, In = x_ref.shape
    H = h_s.shape[-1]

    # ---------- one-time prologue (no serial dependence on the recurrence) ----
    w_ih = w_ih_ref[...].astype(matmul_dtype)
    bias = b_ref[...]                                           # (1, 4H) f32

    # Batched input projection for ALL time steps in one MXU dot.
    x_flat = x_ref[...].reshape(T * B, In).astype(matmul_dtype)
    xproj = jnp.dot(x_flat, w_ih, preferred_element_type=jnp.float32) + bias
    xproj_s[...] = xproj.reshape(T, B, 4 * H)

    # Module quirk: in_drop_mask is applied ONLY to the step-0 input.
    # Overwrite the t=0 projection row with the masked-input projection (tiny dot).
    x0 = x_ref[0].astype(jnp.float32) * in_mask_ref[...].astype(jnp.float32)
    xproj_s[0] = jnp.dot(x0.astype(matmul_dtype), w_ih,
                         preferred_element_type=jnp.float32) + bias

    h_s[...] = jnp.zeros_like(h_s)
    c_s[...] = jnp.zeros_like(c_s)

    w_hh = w_hh_ref[...].astype(matmul_dtype)                   # held in VMEM
    hid_mask = hid_mask_ref[...].astype(jnp.float32)
    out_mask = out_mask_ref[...].astype(jnp.float32)

    # ---------- serial recurrence over T (fully unrolled for LLO visibility) ---
    def step(t, carry):
        h_prev = h_s[...]
        c_prev = c_s[...]

        # PyTorch LSTMCell gate order along 4H: [i, f, g, o].
        gates = xproj_s[t] + jnp.dot(h_prev.astype(matmul_dtype), w_hh,
                                     preferred_element_type=jnp.float32)

        i_g = jax.nn.sigmoid(gates[:, 0 * H:1 * H])
        f_g = jax.nn.sigmoid(gates[:, 1 * H:2 * H])
        g_g = jnp.tanh(gates[:, 2 * H:3 * H])
        o_g = jax.nn.sigmoid(gates[:, 3 * H:4 * H])

        c_new = f_g * c_prev + i_g * g_g
        h_new = o_g * jnp.tanh(c_new)                           # raw hidden output

        # y uses the OUT mask; the carried hidden state uses the HIDDEN mask.
        y_ref[t] = (h_new * out_mask).astype(y_ref.dtype)
        h_s[...] = h_new * hid_mask
        c_s[...] = c_new
        return carry

    jax.lax.fori_loop(0, T, step, 0, unroll=True)

    # Final-state writeback once, after the loop.
    h_out_ref[...] = h_s[...].astype(h_out_ref.dtype)
    c_out_ref[...] = c_s[...].astype(c_out_ref.dtype)


def bayes_lstm_forward(x, w_ih, w_hh, b_ih, b_hh,
                       in_mask, hidden_mask, out_mask,
                       matmul_dtype=jnp.float32):
    """x: (B, T, In); w_ih: (4H, In); w_hh: (4H, H); b_ih/b_hh: (4H,);
       in_mask: (B, In); hidden_mask/out_mask: (B, H).
       Returns (y_seq (B, T, H), (h (B, H), c (B, H)))."""
    B, T, In = x.shape
    H = w_hh.shape[1]

    x_tm = jnp.transpose(x, (1, 0, 2))              # (T, B, In) time-major
    w_ih_t = w_ih.T                                 # (In, 4H)  no in-kernel .T
    w_hh_t = w_hh.T                                 # (H, 4H)
    bias = (b_ih + b_hh).reshape(1, 4 * H).astype(jnp.float32)

    out_shapes = (
        jax.ShapeDtypeStruct((T, B, H), x.dtype),   # y_seq (time-major)
        jax.ShapeDtypeStruct((B, H), x.dtype),      # final h (hidden-dropped)
        jax.ShapeDtypeStruct((B, H), x.dtype),      # final c
    )

    vmem = pltpu.MemorySpace.VMEM
    kernel = functools.partial(_bayes_lstm_kernel, matmul_dtype=matmul_dtype)

    flops = (2 * T * B * In * 4 * H            # batched input projection
             + T * (2 * B * H * 4 * H + 12 * B * H))
    transcendentals = T * B * 5 * H            # 3 sigmoids + 2 tanhs per unit
    bytes_accessed = 4 * (x.size + T * B * H + w_ih.size + w_hh.size + 8 * H
                          + in_mask.size + hidden_mask.size + out_mask.size
                          + 4 * B * H)

    y_tm, h, c = pl.pallas_call(
        kernel,
        out_shape=out_shapes,
        # Single invocation (no grid): whole arrays brought to VMEM once.
        in_specs=[pl.BlockSpec(memory_space=vmem)] * 7,
        out_specs=(pl.BlockSpec(memory_space=vmem),) * 3,
        scratch_shapes=[
            pltpu.VMEM((T, B, 4 * H), jnp.float32),   # hoisted input projection
            pltpu.VMEM((B, H), jnp.float32),          # h carry
            pltpu.VMEM((B, H), jnp.float32),          # c carry
        ],
        compiler_params=pltpu.CompilerParams(
            # Sized against v7x's 64 MiB physical VMEM; trivial at these shapes.
            vmem_limit_bytes=32 * 1024 * 1024),
        cost_estimate=pl.CostEstimate(
            flops=flops,
            transcendentals=transcendentals,
            bytes_accessed=bytes_accessed),
    )(x_tm, w_ih_t, w_hh_t, bias, in_mask, hidden_mask, out_mask)

    return jnp.transpose(y_tm, (1, 0, 2)), (h, c)


def bayes_lstm_reference(x, w_ih, w_hh, b_ih, b_hh,
                         in_mask, hidden_mask, out_mask):
    """Pure-JAX reference reproducing the PyTorch module step by step."""
    B, T, _ = x.shape
    H = w_hh.shape[1]

    def cell(x_t, h, c):
        gates = x_t @ w_ih.T + b_ih + h @ w_hh.T + b_hh
        i, f, g, o = jnp.split(gates, 4, axis=-1)
        i = jax.nn.sigmoid(i)
        f = jax.nn.sigmoid(f)
        g = jnp.tanh(g)
        o = jax.nn.sigmoid(o)
        c_new = f * c + i * g
        h_new = o * jnp.tanh(c_new)
        return h_new, c_new

    h = jnp.zeros((B, H), x.dtype)
    c = jnp.zeros((B, H), x.dtype)
    ys = []
    for t in range(T):
        xin = x[:, t, :] * in_mask if t == 0 else x[:, t, :]
        h_raw, c = cell(xin, h, c)
        ys.append(h_raw * out_mask)
        h = h_raw * hidden_mask
    return jnp.stack(ys, axis=1), (h, c)


if __name__ == "__main__":
    B, T, In, H = 2, 8, 16, 32
    in_dropout, hidden_dropout, out_dropout = 0.5, 0.5, 0.5

    key = jax.random.PRNGKey(0)
    kx, kwi, kwh, kbi, kbh, kmi, kmh, kmo = jax.random.split(key, 8)

    x = jax.random.normal(kx, (B, T, In), dtype=jnp.float32)

    # nn.LSTMCell default init: U(-1/sqrt(H), 1/sqrt(H)), gate order [i, f, g, o].
    bound = 1.0 / (H ** 0.5)
    w_ih = jax.random.uniform(kwi, (4 * H, In), jnp.float32, -bound, bound)
    w_hh = jax.random.uniform(kwh, (4 * H, H), jnp.float32, -bound, bound)
    b_ih = jax.random.uniform(kbi, (4 * H,), jnp.float32, -bound, bound)
    b_hh = jax.random.uniform(kbh, (4 * H,), jnp.float32, -bound, bound)

    # MC-dropout masks: bernoulli(1 - p), 0/1 values, no rescaling (as in the module).
    in_mask = jax.random.bernoulli(kmi, 1.0 - in_dropout, (B, In)).astype(jnp.float32)
    hidden_mask = jax.random.bernoulli(kmh, 1.0 - hidden_dropout, (B, H)).astype(jnp.float32)
    out_mask = jax.random.bernoulli(kmo, 1.0 - out_dropout, (B, H)).astype(jnp.float32)

    y_seq, (h, c) = bayes_lstm_forward(x, w_ih, w_hh, b_ih, b_hh,
                                       in_mask, hidden_mask, out_mask)
    jax.block_until_ready((y_seq, h, c))

    y_ref, (h_ref, c_ref) = bayes_lstm_reference(x, w_ih, w_hh, b_ih, b_hh,
                                                 in_mask, hidden_mask, out_mask)

    assert y_seq.shape == (B, T, H)
    assert h.shape == (B, H) and c.shape == (B, H)
    assert jnp.allclose(y_seq, y_ref, atol=1e-5, rtol=1e-5)
    assert jnp.allclose(h, h_ref, atol=1e-5, rtol=1e-5)
    assert jnp.allclose(c, c_ref, atol=1e-5, rtol=1e-5)

    print("KERNEL_OK")
</pallas_src>

<mosaic_0001>
module attributes {stable_mosaic.version = 11 : i64} {
  func.func @_bayes_lstm_kernel(%arg0: memref<8x2x16xf32, #tpu.memory_space<vmem>>, %arg1: memref<16x128xf32, #tpu.memory_space<vmem>>, %arg2: memref<32x128xf32, #tpu.memory_space<vmem>>, %arg3: memref<1x128xf32, #tpu.memory_space<vmem>>, %arg4: memref<2x16xf32, #tpu.memory_space<vmem>>, %arg5: memref<2x32xf32, #tpu.memory_space<vmem>>, %arg6: memref<2x32xf32, #tpu.memory_space<vmem>>, %arg7: memref<8x2x32xf32, #tpu.memory_space<vmem>>, %arg8: memref<2x32xf32, #tpu.memory_space<vmem>>, %arg9: memref<2x32xf32, #tpu.memory_space<vmem>>, %arg10: memref<8x2x128xf32, #tpu.memory_space<vmem>>, %arg11: memref<2x32xf32, #tpu.memory_space<vmem>>, %arg12: memref<2x32xf32, #tpu.memory_space<vmem>>) attributes {dimension_semantics = [], scalar_prefetch = 0 : i64, scratch_operands = 3 : i64, tpu.core_type = #tpu.core_type<tc>} {
    %c0 = arith.constant 0 : index
    %c0_0 = arith.constant 0 : index
    %0 = vector.load %arg1[%c0, %c0_0] : memref<16x128xf32, #tpu.memory_space<vmem>>, vector<16x128xf32>
    %c0_1 = arith.constant 0 : index
    %c0_2 = arith.constant 0 : index
    %1 = vector.load %arg3[%c0_1, %c0_2] : memref<1x128xf32, #tpu.memory_space<vmem>>, vector<1x128xf32>
    %c0_3 = arith.constant 0 : index
    %c0_4 = arith.constant 0 : index
    %c0_5 = arith.constant 0 : index
    %2 = vector.load %arg0[%c0_3, %c0_4, %c0_5] : memref<8x2x16xf32, #tpu.memory_space<vmem>>, vector<8x2x16xf32>
    %3 = vector.shape_cast %2 : vector<8x2x16xf32> to vector<16x16xf32>
    %cst = arith.constant dense<0.000000e+00> : vector<16x128xf32>
    %4 = tpu.matmul %3, %0, %cst {dimension_numbers = #tpu.dot_dimension_numbers<[1], [0], [0], [1], [0, 0, 1, 1], [], []>} : vector<16x16xf32>, vector<16x128xf32>, vector<16x128xf32> -> vector<16x128xf32>
    %5 = vector.broadcast %1 : vector<1x128xf32> to vector<16x128xf32>
    %6 = arith.addf %4, %5 : vector<16x128xf32>
    %7 = vector.shape_cast %6 : vector<16x128xf32> to vector<8x2x128xf32>
    %c0_6 = arith.constant 0 : index
    %c0_7 = arith.constant 0 : index
    %c0_8 = arith.constant 0 : index
    %8 = vector.load %arg10[%c0_6, %c0_7, %c0_8] : memref<8x2x128xf32, #tpu.memory_space<vmem>>, vector<8x2x128xf32>
    tpu.vector_store %arg10[%c0_6, %c0_7, %c0_8], %7 {strides = array<i32>} : memref<8x2x128xf32, #tpu.memory_space<vmem>>, vector<8x2x128xf32>,
    %c0_9 = arith.constant 0 : index
    %c0_10 = arith.constant 0 : index
    %c0_11 = arith.constant 0 : index
    %9 = vector.load %arg0[%c0_9, %c0_10, %c0_11] : memref<8x2x16xf32, #tpu.memory_space<vmem>>, vector<1x2x16xf32>
    %10 = vector.shape_cast %9 : vector<1x2x16xf32> to vector<2x16xf32>
    %c0_12 = arith.constant 0 : index
    %c0_13 = arith.constant 0 : index
    %11 = vector.load %arg4[%c0_12, %c0_13] : memref<2x16xf32, #tpu.memory_space<vmem>>, vector<2x16xf32>
    %12 = arith.mulf %10, %11 : vector<2x16xf32>
    %cst_14 = arith.constant dense<0.000000e+00> : vector<2x128xf32>
    %13 = tpu.matmul %12, %0, %cst_14 {dimension_numbers = #tpu.dot_dimension_numbers<[1], [0], [0], [1], [0, 0, 1, 1], [], []>} : vector<2x16xf32>, vector<16x128xf32>, vector<2x128xf32> -> vector<2x128xf32>
    %14 = vector.broadcast %1 : vector<1x128xf32> to vector<2x128xf32>
    %15 = arith.addf %13, %14 : vector<2x128xf32>
    %c0_15 = arith.constant 0 : index
    %c0_16 = arith.constant 0 : index
    %c0_17 = arith.constant 0 : index
    %16 = vector.load %arg10[%c0_15, %c0_16, %c0_17] : memref<8x2x128xf32, #tpu.memory_space<vmem>>, vector<1x2x128xf32>
    %17 = vector.shape_cast %16 : vector<1x2x128xf32> to vector<2x128xf32>
    %18 = vector.shape_cast %15 : vector<2x128xf32> to vector<1x2x128xf32>
    tpu.vector_store %arg10[%c0_15, %c0_16, %c0_17], %18 {strides = array<i32>} : memref<8x2x128xf32, #tpu.memory_space<vmem>>, vector<1x2x128xf32>,
    %cst_18 = arith.constant 0.000000e+00 : f32
    %19 = vector.broadcast %cst_18 : f32 to vector<2x32xf32>
    %c0_19 = arith.constant 0 : index
    %c0_20 = arith.constant 0 : index
    %20 = vector.load %arg11[%c0_19, %c0_20] : memref<2x32xf32, #tpu.memory_space<vmem>>, vector<2x32xf32>
    tpu.vector_store %arg11[%c0_19, %c0_20], %19 {strides = array<i32>} : memref<2x32xf32, #tpu.memory_space<vmem>>, vector<2x32xf32>,
    %cst_21 = arith.constant 0.000000e+00 : f32
    %21 = vector.broadcast %cst_21 : f32 to vector<2x32xf32>
    %c0_22 = arith.constant 0 : index
    %c0_23 = arith.constant 0 : index
    %22 = vector.load %arg12[%c0_22, %c0_23] : memref<2x32xf32, #tpu.memory_space<vmem>>, vector<2x32xf32>
    tpu.vector_store %arg12[%c0_22, %c0_23], %21 {strides = array<i32>} : memref<2x32xf32, #tpu.memory_space<vmem>>, vector<2x32xf32>,
    %c0_24 = arith.constant 0 : index
    %c0_25 = arith.constant 0 : index
    %23 = vector.load %arg2[%c0_24, %c0_25] : memref<32x128xf32, #tpu.memory_space<vmem>>, vector<32x128xf32>
    %c0_26 = arith.constant 0 : index
    %c0_27 = arith.constant 0 : index
    %24 = vector.load %arg5[%c0_26, %c0_27] : memref<2x32xf32, #tpu.memory_space<vmem>>, vector<2x32xf32>
    %c0_28 = arith.constant 0 : index
    %c0_29 = arith.constant 0 : index
    %25 = vector.load %arg6[%c0_28, %c0_29] : memref<2x32xf32, #tpu.memory_space<vmem>>, vector<2x32xf32>
    %c0_i32 = arith.constant 0 : i32
    %c0_30 = arith.constant 0 : index
    %c0_31 = arith.constant 0 : index
    %26 = vector.load %arg11[%c0_30, %c0_31] : memref<2x32xf32, #tpu.memory_space<vmem>>, vector<2x32xf32>
    %c0_32 = arith.constant 0 : index
    %c0_33 = arith.constant 0 : index
    %27 = vector.load %arg12[%c0_32, %c0_33] : memref<2x32xf32, #tpu.memory_space<vmem>>, vector<2x32xf32>
    %28 = arith.index_cast %c0_i32 : i32 to index
    %c0_34 = arith.constant 0 : index
    %c0_35 = arith.constant 0 : index
    %29 = vector.load %arg10[%28, %c0_34, %c0_35] : memref<8x2x128xf32, #tpu.memory_space<vmem>>, vector<1x2x128xf32>
    %30 = vector.shape_cast %29 : vector<1x2x128xf32> to vector<2x128xf32>
    %cst_36 = arith.constant dense<0.000000e+00> : vector<2x128xf32>
    %31 = tpu.matmul %26, %23, %cst_36 {dimension_numbers = #tpu.dot_dimension_numbers<[1], [0], [0], [1], [0, 0, 1, 1], [], []>} : vector<2x32xf32>, vector<32x128xf32>, vector<2x128xf32> -> vector<2x128xf32>
    %32 = arith.addf %30, %31 : vector<2x128xf32>
    %33 = vector.extract_strided_slice %32 {offsets = [0, 0], sizes = [2, 32], strides = [1, 1]} : vector<2x128xf32> to vector<2x32xf32>
    %34 = arith.negf %33 : vector<2x32xf32>
    %35 = math.exp %34 : vector<2x32xf32>
    %cst_37 = arith.constant 1.000000e+00 : f32
    %36 = vector.broadcast %cst_37 : f32 to vector<2x32xf32>
    %37 = arith.addf %36, %35 : vector<2x32xf32>
    %38 = arith.divf %36, %37 : vector<2x32xf32>
    %39 = vector.extract_strided_slice %32 {offsets = [0, 32], sizes = [2, 32], strides = [1, 1]} : vector<2x128xf32> to vector<2x32xf32>
    %40 = arith.negf %39 : vector<2x32xf32>
    %41 = math.exp %40 : vector<2x32xf32>
    %cst_38 = arith.constant 1.000000e+00 : f32
    %42 = vector.broadcast %cst_38 : f32 to vector<2x32xf32>
    %43 = arith.addf %42, %41 : vector<2x32xf32>
    %44 = arith.divf %42, %43 : vector<2x32xf32>
    %45 = vector.extract_strided_slice %32 {offsets = [0, 64], sizes = [2, 32], strides = [1, 1]} : vector<2x128xf32> to vector<2x32xf32>
    %46 = math.tanh %45 : vector<2x32xf32>
    %47 = vector.extract_strided_slice %32 {offsets = [0, 96], sizes = [2, 32], strides = [1, 1]} : vector<2x128xf32> to vector<2x32xf32>
    %48 = arith.negf %47 : vector<2x32xf32>
    %49 = math.exp %48 : vector<2x32xf32>
    %cst_39 = arith.constant 1.000000e+00 : f32
    %50 = vector.broadcast %cst_39 : f32 to vector<2x32xf32>
    %51 = arith.addf %50, %49 : vector<2x32xf32>
    %52 = arith.divf %50, %51 : vector<2x32xf32>
    %53 = arith.mulf %44, %27 : vector<2x32xf32>
    %54 = arith.mulf %38, %46 : vector<2x32xf32>
    %55 = arith.addf %53, %54 : vector<2x32xf32>
    %56 = math.tanh %55 : vector<2x32xf32>
    %57 = arith.mulf %52, %56 : vector<2x32xf32>
    %58 = arith.mulf %57, %25 : vector<2x32xf32>
    %59 = arith.index_cast %c0_i32 : i32 to index
    %c0_40 = arith.constant 0 : index
    %c0_41 = arith.constant 0 : index
    %60 = vector.load %arg7[%59, %c0_40, %c0_41] : memref<8x2x32xf32, #tpu.memory_space<vmem>>, vector<1x2x32xf32>
    %61 = vector.shape_cast %60 : vector<1x2x32xf32> to vector<2x32xf32>
    %62 = vector.shape_cast %58 : vector<2x32xf32> to vector<1x2x32xf32>
    tpu.vector_store %arg7[%59, %c0_40, %c0_41], %62 {strides = array<i32>} : memref<8x2x32xf32, #tpu.memory_space<vmem>>, vector<1x2x32xf32>,
    %63 = arith.mulf %57, %24 : vector<2x32xf32>
    %c0_42 = arith.constant 0 : index
    %c0_43 = arith.constant 0 : index
    %64 = vector.load %arg11[%c0_42, %c0_43] : memref<2x32xf32, #tpu.memory_space<vmem>>, vector<2x32xf32>
    tpu.vector_store %arg11[%c0_42, %c0_43], %63 {strides = array<i32>} : memref<2x32xf32, #tpu.memory_space<vmem>>, vector<2x32xf32>,
    %c0_44 = arith.constant 0 : index
    %c0_45 = arith.constant 0 : index
    %65 = vector.load %arg12[%c0_44, %c0_45] : memref<2x32xf32, #tpu.memory_space<vmem>>, vector<2x32xf32>
    tpu.vector_store %arg12[%c0_44, %c0_45], %55 {strides = array<i32>} : memref<2x32xf32, #tpu.memory_space<vmem>>, vector<2x32xf32>,
    %c1_i32 = arith.constant 1 : i32
    %c0_46 = arith.constant 0 : index
    %c0_47 = arith.constant 0 : index
    %66 = vector.load %arg11[%c0_46, %c0_47] : memref<2x32xf32, #tpu.memory_space<vmem>>, vector<2x32xf32>
    %c0_48 = arith.constant 0 : index
    %c0_49 = arith.constant 0 : index
    %67 = vector.load %arg12[%c0_48, %c0_49] : memref<2x32xf32, #tpu.memory_space<vmem>>, vector<2x32xf32>
    %68 = arith.index_cast %c1_i32 : i32 to index
    %c0_50 = arith.constant 0 : index
    %c0_51 = arith.constant 0 : index
    %69 = vector.load %arg10[%68, %c0_50, %c0_51] : memref<8x2x128xf32, #tpu.memory_space<vmem>>, vector<1x2x128xf32>
    %70 = vector.shape_cast %69 : vector<1x2x128xf32> to vector<2x128xf32>
    %cst_52 = arith.constant dense<0.000000e+00> : vector<2x128xf32>
    %71 = tpu.matmul %66, %23, %cst_52 {dimension_numbers = #tpu.dot_dimension_numbers<[1], [0], [0], [1], [0, 0, 1, 1], [], []>} : vector<2x32xf32>, vector<32x128xf32>, vector<2x128xf32> -> vector<2x128xf32>
    %72 = arith.addf %70, %71 : vector<2x128xf32>
    %73 = vector.extract_strided_slice %72 {offsets = [0, 0], sizes = [2, 32], strides = [1, 1]} : vector<2x128xf32> to vector<2x32xf32>
    %74 = arith.negf %73 : vector<2x32xf32>
    %75 = math.exp %74 : vector<2x32xf32>
    %cst_53 = arith.constant 1.000000e+00 : f32
    %76 = vector.broadcast %cst_53 : f32 to vector<2x32xf32>
    %77 = arith.addf %76, %75 : vector<2x32xf32>
    %78 = arith.divf %76, %77 : vector<2x32xf32>
    %79 = vector.extract_strided_slice %72 {offsets = [0, 32], sizes = [2, 32], strides = [1, 1]} : vector<2x128xf32> to vector<2x32xf32>
    %80 = arith.negf %79 : vector<2x32xf32>
    %81 = math.exp %80 : vector<2x32xf32>
    %cst_54 = arith.constant 1.000000e+00 : f32
    %82 = vector.broadcast %cst_54 : f32 to vector<2x32xf32>
    %83 = arith.addf %82, %81 : vector<2x32xf32>
    %84 = arith.divf %82, %83 : vector<2x32xf32>
    %85 = vector.extract_strided_slice %72 {offsets = [0, 64], sizes = [2, 32], strides = [1, 1]} : vector<2x128xf32> to vector<2x32xf32>
    %86 = math.tanh %85 : vector<2x32xf32>
    %87 = vector.extract_strided_slice %72 {offsets = [0, 96], sizes = [2, 32], strides = [1, 1]} : vector<2x128xf32> to vector<2x32xf32>
    %88 = arith.negf %87 : vector<2x32xf32>
    %89 = math.exp %88 : vector<2x32xf32>
    %cst_55 = arith.constant 1.000000e+00 : f32
    %90 = vector.broadcast %cst_55 : f32 to vector<2x32xf32>
    %91 = arith.addf %90, %89 : vector<2x32xf32>
    %92 = arith.divf %90, %91 : vector<2x32xf32>
    %93 = arith.mulf %84, %67 : vector<2x32xf32>
    %94 = arith.mulf %78, %86 : vector<2x32xf32>
    %95 = arith.addf %93, %94 : vector<2x32xf32>
    %96 = math.tanh %95 : vector<2x32xf32>
    %97 = arith.mulf %92, %96 : vector<2x32xf32>
    %98 = arith.mulf %97, %25 : vector<2x32xf32>
    %99 = arith.index_cast %c1_i32 : i32 to index
    %c0_56 = arith.constant 0 : index
    %c0_57 = arith.constant 0 : index
    %100 = vector.load %arg7[%99, %c0_56, %c0_57] : memref<8x2x32xf32, #tpu.memory_space<vmem>>, vector<1x2x32xf32>
    %101 = vector.shape_cast %100 : vector<1x2x32xf32> to vector<2x32xf32>
    %102 = vector.shape_cast %98 : vector<2x32xf32> to vector<1x2x32xf32>
    tpu.vector_store %arg7[%99, %c0_56, %c0_57], %102 {strides = array<i32>} : memref<8x2x32xf32, #tpu.memory_space<vmem>>, vector<1x2x32xf32>,
    %103 = arith.mulf %97, %24 : vector<2x32xf32>
    %c0_58 = arith.constant 0 : index
    %c0_59 = arith.constant 0 : index
    %104 = vector.load %arg11[%c0_58, %c0_59] : memref<2x32xf32, #tpu.memory_space<vmem>>, vector<2x32xf32>
    tpu.vector_store %arg11[%c0_58, %c0_59], %103 {strides = array<i32>} : memref<2x32xf32, #tpu.memory_space<vmem>>, vector<2x32xf32>,
    %c0_60 = arith.constant 0 : index
    %c0_61 = arith.constant 0 : index
    %105 = vector.load %arg12[%c0_60, %c0_61] : memref<2x32xf32, #tpu.memory_space<vmem>>, vector<2x32xf32>
    tpu.vector_store %arg12[%c0_60, %c0_61], %95 {strides = array<i32>} : memref<2x32xf32, #tpu.memory_space<vmem>>, vector<2x32xf32>,
    %c2_i32 = arith.constant 2 : i32
    %c0_62 = arith.constant 0 : index
    %c0_63 = arith.constant 0 : index
    %106 = vector.load %arg11[%c0_62, %c0_63] : memref<2x32xf32, #tpu.memory_space<vmem>>, vector<2x32xf32>
    %c0_64 = arith.constant 0 : index
    %c0_65 = arith.constant 0 : index
    %107 = vector.load %arg12[%c0_64, %c0_65] : memref<2x32xf32, #tpu.memory_space<vmem>>, vector<2x32xf32>
    %108 = arith.index_cast %c2_i32 : i32 to index
    %c0_66 = arith.constant 0 : index
    %c0_67 = arith.constant 0 : index
    %109 = vector.load %arg10[%108, %c0_66, %c0_67] : memref<8x2x128xf32, #tpu.memory_space<vmem>>, vector<1x2x128xf32>
    %110 = vector.shape_cast %109 : vector<1x2x128xf32> to vector<2x128xf32>
    %cst_68 = arith.constant dense<0.000000e+00> : vector<2x128xf32>
    %111 = tpu.matmul %106, %23, %cst_68 {dimension_numbers = #tpu.dot_dimension_numbers<[1], [0], [0], [1], [0, 0, 1, 1], [], []>} : vector<2x32xf32>, vector<32x128xf32>, vector<2x128xf32> -> vector<2x128xf32>
    %112 = arith.addf %110, %111 : vector<2x128xf32>
    %113 = vector.extract_strided_slice %112 {offsets = [0, 0], sizes = [2, 32], strides = [1, 1]} : vector<2x128xf32> to vector<2x32xf32>
    %114 = arith.negf %113 : vector<2x32xf32>
    %115 = math.exp %114 : vector<2x32xf32>
    %cst_69 = arith.constant 1.000000e+00 : f32
    %116 = vector.broadcast %cst_69 : f32 to vector<2x32xf32>
    %117 = arith.addf %116, %115 : vector<2x32xf32>
    %118 = arith.divf %116, %117 : vector<2x32xf32>
    %119 = vector.extract_strided_slice %112 {offsets = [0, 32], sizes = [2, 32], strides = [1, 1]} : vector<2x128xf32> to vector<2x32xf32>
    %120 = arith.negf %119 : vector<2x32xf32>
    %121 = math.exp %120 : vector<2x32xf32>
    %cst_70 = arith.constant 1.000000e+00 : f32
    %122 = vector.broadcast %cst_70 : f32 to vector<2x32xf32>
    %123 = arith.addf %122, %121 : vector<2x32xf32>
    %124 = arith.divf %122, %123 : vector<2x32xf32>
    %125 = vector.extract_strided_slice %112 {offsets = [0, 64], sizes = [2, 32], strides = [1, 1]} : vector<2x128xf32> to vector<2x32xf32>
    %126 = math.tanh %125 : vector<2x32xf32>
    %127 = vector.extract_strided_slice %112 {offsets = [0, 96], sizes = [2, 32], strides = [1, 1]} : vector<2x128xf32> to vector<2x32xf32>
    %128 = arith.negf %127 : vector<2x32xf32>
    %129 = math.exp %128 : vector<2x32xf32>
    %cst_71 = arith.constant 1.000000e+00 : f32
    %130 = vector.broadcast %cst_71 : f32 to vector<2x32xf32>
    %131 = arith.addf %130, %129 : vector<2x32xf32>
    %132 = arith.divf %130, %131 : vector<2x32xf32>
    %133 = arith.mulf %124, %107 : vector<2x32xf32>
    %134 = arith.mulf %118, %126 : vector<2x32xf32>
    %135 = arith.addf %133, %134 : vector<2x32xf32>
    %136 = math.tanh %135 : vector<2x32xf32>
    %137 = arith.mulf %132, %136 : vector<2x32xf32>
    %138 = arith.mulf %137, %25 : vector<2x32xf32>
    %139 = arith.index_cast %c2_i32 : i32 to index
    %c0_72 = arith.constant 0 : index
    %c0_73 = arith.constant 0 : index
    %140 = vector.load %arg7[%139, %c0_72, %c0_73] : memref<8x2x32xf32, #tpu.memory_space<vmem>>, vector<1x2x32xf32>
    %141 = vector.shape_cast %140 : vector<1x2x32xf32> to vector<2x32xf32>
    %142 = vector.shape_cast %138 : vector<2x32xf32> to vector<1x2x32xf32>
    tpu.vector_store %arg7[%139, %c0_72, %c0_73], %142 {strides = array<i32>} : memref<8x2x32xf32, #tpu.memory_space<vmem>>, vector<1x2x32xf32>,
    %143 = arith.mulf %137, %24 : vector<2x32xf32>
    %c0_74 = arith.constant 0 : index
    %c0_75 = arith.constant 0 : index
    %144 = vector.load %arg11[%c0_74, %c0_75] : memref<2x32xf32, #tpu.memory_space<vmem>>, vector<2x32xf32>
    tpu.vector_store %arg11[%c0_74, %c0_75], %143 {strides = array<i32>} : memref<2x32xf32, #tpu.memory_space<vmem>>, vector<2x32xf32>,
    %c0_76 = arith.constant 0 : index
    %c0_77 = arith.constant 0 : index
    %145 = vector.load %arg12[%c0_76, %c0_77] : memref<2x32xf32, #tpu.memory_space<vmem>>, vector<2x32xf32>
    tpu.vector_store %arg12[%c0_76, %c0_77], %135 {strides = array<i32>} : memref<2x32xf32, #tpu.memory_space<vmem>>, vector<2x32xf32>,
    %c3_i32 = arith.constant 3 : i32
    %c0_78 = arith.constant 0 : index
    %c0_79 = arith.constant 0 : index
    %146 = vector.load %arg11[%c0_78, %c0_79] : memref<2x32xf32, #tpu.memory_space<vmem>>, vector<2x32xf32>
    %c0_80 = arith.constant 0 : index
    %c0_81 = arith.constant 0 : index
    %147 = vector.load %arg12[%c0_80, %c0_81] : memref<2x32xf32, #tpu.memory_space<vmem>>, vector<2x32xf32>
    %148 = arith.index_cast %c3_i32 : i32 to index
    %c0_82 = arith.constant 0 : index
    %c0_83 = arith.constant 0 : index
    %149 = vector.load %arg10[%148, %c0_82, %c0_83] : memref<8x2x128xf32, #tpu.memory_space<vmem>>, vector<1x2x128xf32>
    %150 = vector.shape_cast %149 : vector<1x2x128xf32> to vector<2x128xf32>
    %cst_84 = arith.constant dense<0.000000e+00> : vector<2x128xf32>
    %151 = tpu.matmul %146, %23, %cst_84 {dimension_numbers = #tpu.dot_dimension_numbers<[1], [0], [0], [1], [0, 0, 1, 1], [], []>} : vector<2x32xf32>, vector<32x128xf32>, vector<2x128xf32> -> vector<2x128xf32>
    %152 = arith.addf %150, %151 : vector<2x128xf32>
    %153 = vector.extract_strided_slice %152 {offsets = [0, 0], sizes = [2, 32], strides = [1, 1]} : vector<2x128xf32> to vector<2x32xf32>
    %154 = arith.negf %153 : vector<2x32xf32>
    %155 = math.exp %154 : vector<2x32xf32>
    %cst_85 = arith.constant 1.000000e+00 : f32
    %156 = vector.broadcast %cst_85 : f32 to vector<2x32xf32>
    %157 = arith.addf %156, %155 : vector<2x32xf32>
    %158 = arith.divf %156, %157 : vector<2x32xf32>
    %159 = vector.extract_strided_slice %152 {offsets = [0, 32], sizes = [2, 32], strides = [1, 1]} : vector<2x128xf32> to vector<2x32xf32>
    %160 = arith.negf %159 : vector<2x32xf32>
    %161 = math.exp %160 : vector<2x32xf32>
    %cst_86 = arith.constant 1.000000e+00 : f32
    %162 = vector.broadcast %cst_86 : f32 to vector<2x32xf32>
    %163 = arith.addf %162, %161 : vector<2x32xf32>
    %164 = arith.divf %162, %163 : vector<2x32xf32>
    %165 = vector.extract_strided_slice %152 {offsets = [0, 64], sizes = [2, 32], strides = [1, 1]} : vector<2x128xf32> to vector<2x32xf32>
    %166 = math.tanh %165 : vector<2x32xf32>
    %167 = vector.extract_strided_slice %152 {offsets = [0, 96], sizes = [2, 32], strides = [1, 1]} : vector<2x128xf32> to vector<2x32xf32>
    %168 = arith.negf %167 : vector<2x32xf32>
    %169 = math.exp %168 : vector<2x32xf32>
    %cst_87 = arith.constant 1.000000e+00 : f32
    %170 = vector.broadcast %cst_87 : f32 to vector<2x32xf32>
    %171 = arith.addf %170, %169 : vector<2x32xf32>
    %172 = arith.divf %170, %171 : vector<2x32xf32>
    %173 = arith.mulf %164, %147 : vector<2x32xf32>
    %174 = arith.mulf %158, %166 : vector<2x32xf32>
    %175 = arith.addf %173, %174 : vector<2x32xf32>
    %176 = math.tanh %175 : vector<2x32xf32>
    %177 = arith.mulf %172, %176 : vector<2x32xf32>
    %178 = arith.mulf %177, %25 : vector<2x32xf32>
    %179 = arith.index_cast %c3_i32 : i32 to index
    %c0_88 = arith.constant 0 : index
    %c0_89 = arith.constant 0 : index
    %180 = vector.load %arg7[%179, %c0_88, %c0_89] : memref<8x2x32xf32, #tpu.memory_space<vmem>>, vector<1x2x32xf32>
    %181 = vector.shape_cast %180 : vector<1x2x32xf32> to vector<2x32xf32>
    %182 = vector.shape_cast %178 : vector<2x32xf32> to vector<1x2x32xf32>
    tpu.vector_store %arg7[%179, %c0_88, %c0_89], %182 {strides = array<i32>} : memref<8x2x32xf32, #tpu.memory_space<vmem>>, vector<1x2x32xf32>,
    %183 = arith.mulf %177, %24 : vector<2x32xf32>
    %c0_90 = arith.constant 0 : index
    %c0_91 = arith.constant 0 : index
    %184 = vector.load %arg11[%c0_90, %c0_91] : memref<2x32xf32, #tpu.memory_space<vmem>>, vector<2x32xf32>
    tpu.vector_store %arg11[%c0_90, %c0_91], %183 {strides = array<i32>} : memref<2x32xf32, #tpu.memory_space<vmem>>, vector<2x32xf32>,
    %c0_92 = arith.constant 0 : index
    %c0_93 = arith.constant 0 : index
    %185 = vector.load %arg12[%c0_92, %c0_93] : memref<2x32xf32, #tpu.memory_space<vmem>>, vector<2x32xf32>
    tpu.vector_store %arg12[%c0_92, %c0_93], %175 {strides = array<i32>} : memref<2x32xf32, #tpu.memory_space<vmem>>, vector<2x32xf32>,
    %c4_i32 = arith.constant 4 : i32
    %c0_94 = arith.constant 0 : index
    %c0_95 = arith.constant 0 : index
    %186 = vector.load %arg11[%c0_94, %c0_95] : memref<2x32xf32, #tpu.memory_space<vmem>>, vector<2x32xf32>
    %c0_96 = arith.constant 0 : index
    %c0_97 = arith.constant 0 : index
    %187 = vector.load %arg12[%c0_96, %c0_97] : memref<2x32xf32, #tpu.memory_space<vmem>>, vector<2x32xf32>
    %188 = arith.index_cast %c4_i32 : i32 to index
    %c0_98 = arith.constant 0 : index
    %c0_99 = arith.constant 0 : index
    %189 = vector.load %arg10[%188, %c0_98, %c0_99] : memref<8x2x128xf32, #tpu.memory_space<vmem>>, vector<1x2x128xf32>
    %190 = vector.shape_cast %189 : vector<1x2x128xf32> to vector<2x128xf32>
    %cst_100 = arith.constant dense<0.000000e+00> : vector<2x128xf32>
    %191 = tpu.matmul %186, %23, %cst_100 {dimension_numbers = #tpu.dot_dimension_numbers<[1], [0], [0], [1], [0, 0, 1, 1], [], []>} : vector<2x32xf32>, vector<32x128xf32>, vector<2x128xf32> -> vector<2x128xf32>
    %192 = arith.addf %190, %191 : vector<2x128xf32>
    %193 = vector.extract_strided_slice %192 {offsets = [0, 0], sizes = [2, 32], strides = [1, 1]} : vector<2x128xf32> to vector<2x32xf32>
    %194 = arith.negf %193 : vector<2x32xf32>
    %195 = math.exp %194 : vector<2x32xf32>
    %cst_101 = arith.constant 1.000000e+00 : f32
    %196 = vector.broadcast %cst_101 : f32 to vector<2x32xf32>
    %197 = arith.addf %196, %195 : vector<2x32xf32>
    %198 = arith.divf %196, %197 : vector<2x32xf32>
    %199 = vector.extract_strided_slice %192 {offsets = [0, 32], sizes = [2, 32], strides = [1, 1]} : vector<2x128xf32> to vector<2x32xf32>
    %200 = arith.negf %199 : vector<2x32xf32>
    %201 = math.exp %200 : vector<2x32xf32>
    %cst_102 = arith.constant 1.000000e+00 : f32
    %202 = vector.broadcast %cst_102 : f32 to vector<2x32xf32>
    %203 = arith.addf %202, %201 : vector<2x32xf32>
    %204 = arith.divf %202, %203 : vector<2x32xf32>
    %205 = vector.extract_strided_slice %192 {offsets = [0, 64], sizes = [2, 32], strides = [1, 1]} : vector<2x128xf32> to vector<2x32xf32>
    %206 = math.tanh %205 : vector<2x32xf32>
    %207 = vector.extract_strided_slice %192 {offsets = [0, 96], sizes = [2, 32], strides = [1, 1]} : vector<2x128xf32> to vector<2x32xf32>
    %208 = arith.negf %207 : vector<2x32xf32>
    %209 = math.exp %208 : vector<2x32xf32>
    %cst_103 = arith.constant 1.000000e+00 : f32
    %210 = vector.broadcast %cst_103 : f32 to vector<2x32xf32>
    %211 = arith.addf %210, %209 : vector<2x32xf32>
    %212 = arith.divf %210, %211 : vector<2x32xf32>
    %213 = arith.mulf %204, %187 : vector<2x32xf32>
    %214 = arith.mulf %198, %206 : vector<2x32xf32>
    %215 = arith.addf %213, %214 : vector<2x32xf32>
    %216 = math.tanh %215 : vector<2x32xf32>
    %217 = arith.mulf %212, %216 : vector<2x32xf32>
    %218 = arith.mulf %217, %25 : vector<2x32xf32>
    %219 = arith.index_cast %c4_i32 : i32 to index
    %c0_104 = arith.constant 0 : index
    %c0_105 = arith.constant 0 : index
    %220 = vector.load %arg7[%219, %c0_104, %c0_105] : memref<8x2x32xf32, #tpu.memory_space<vmem>>, vector<1x2x32xf32>
    %221 = vector.shape_cast %220 : vector<1x2x32xf32> to vector<2x32xf32>
    %222 = vector.shape_cast %218 : vector<2x32xf32> to vector<1x2x32xf32>
    tpu.vector_store %arg7[%219, %c0_104, %c0_105], %222 {strides = array<i32>} : memref<8x2x32xf32, #tpu.memory_space<vmem>>, vector<1x2x32xf32>,
    %223 = arith.mulf %217, %24 : vector<2x32xf32>
    %c0_106 = arith.constant 0 : index
    %c0_107 = arith.constant 0 : index
    %224 = vector.load %arg11[%c0_106, %c0_107] : memref<2x32xf32, #tpu.memory_space<vmem>>, vector<2x32xf32>
    tpu.vector_store %arg11[%c0_106, %c0_107], %223 {strides = array<i32>} : memref<2x32xf32, #tpu.memory_space<vmem>>, vector<2x32xf32>,
    %c0_108 = arith.constant 0 : index
    %c0_109 = arith.constant 0 : index
    %225 = vector.load %arg12[%c0_108, %c0_109] : memref<2x32xf32, #tpu.memory_space<vmem>>, vector<2x32xf32>
    tpu.vector_store %arg12[%c0_108, %c0_109], %215 {strides = array<i32>} : memref<2x32xf32, #tpu.memory_space<vmem>>, vector<2x32xf32>,
    %c5_i32 = arith.constant 5 : i32
    %c0_110 = arith.constant 0 : index
    %c0_111 = arith.constant 0 : index
    %226 = vector.load %arg11[%c0_110, %c0_111] : memref<2x32xf32, #tpu.memory_space<vmem>>, vector<2x32xf32>
    %c0_112 = arith.constant 0 : index
    %c0_113 = arith.constant 0 : index
    %227 = vector.load %arg12[%c0_112, %c0_113] : memref<2x32xf32, #tpu.memory_space<vmem>>, vector<2x32xf32>
    %228 = arith.index_cast %c5_i32 : i32 to index
    %c0_114 = arith.constant 0 : index
    %c0_115 = arith.constant 0 : index
    %229 = vector.load %arg10[%228, %c0_114, %c0_115] : memref<8x2x128xf32, #tpu.memory_space<vmem>>, vector<1x2x128xf32>
    %230 = vector.shape_cast %229 : vector<1x2x128xf32> to vector<2x128xf32>
    %cst_116 = arith.constant dense<0.000000e+00> : vector<2x128xf32>
    %231 = tpu.matmul %226, %23, %cst_116 {dimension_numbers = #tpu.dot_dimension_numbers<[1], [0], [0], [1], [0, 0, 1, 1], [], []>} : vector<2x32xf32>, vector<32x128xf32>, vector<2x128xf32> -> vector<2x128xf32>
    %232 = arith.addf %230, %231 : vector<2x128xf32>
    %233 = vector.extract_strided_slice %232 {offsets = [0, 0], sizes = [2, 32], strides = [1, 1]} : vector<2x128xf32> to vector<2x32xf32>
    %234 = arith.negf %233 : vector<2x32xf32>
    %235 = math.exp %234 : vector<2x32xf32>
    %cst_117 = arith.constant 1.000000e+00 : f32
    %236 = vector.broadcast %cst_117 : f32 to vector<2x32xf32>
    %237 = arith.addf %236, %235 : vector<2x32xf32>
    %238 = arith.divf %236, %237 : vector<2x32xf32>
    %239 = vector.extract_strided_slice %232 {offsets = [0, 32], sizes = [2, 32], strides = [1, 1]} : vector<2x128xf32> to vector<2x32xf32>
    %240 = arith.negf %239 : vector<2x32xf32>
    %241 = math.exp %240 : vector<2x32xf32>
    %cst_118 = arith.constant 1.000000e+00 : f32
    %242 = vector.broadcast %cst_118 : f32 to vector<2x32xf32>
    %243 = arith.addf %242, %241 : vector<2x32xf32>
    %244 = arith.divf %242, %243 : vector<2x32xf32>
    %245 = vector.extract_strided_slice %232 {offsets = [0, 64], sizes = [2, 32], strides = [1, 1]} : vector<2x128xf32> to vector<2x32xf32>
    %246 = math.tanh %245 : vector<2x32xf32>
    %247 = vector.extract_strided_slice %232 {offsets = [0, 96], sizes = [2, 32], strides = [1, 1]} : vector<2x128xf32> to vector<2x32xf32>
    %248 = arith.negf %247 : vector<2x32xf32>
    %249 = math.exp %248 : vector<2x32xf32>
    %cst_119 = arith.constant 1.000000e+00 : f32
    %250 = vector.broadcast %cst_119 : f32 to vector<2x32xf32>
    %251 = arith.addf %250, %249 : vector<2x32xf32>
    %252 = arith.divf %250, %251 : vector<2x32xf32>
    %253 = arith.mulf %244, %227 : vector<2x32xf32>
    %254 = arith.mulf %238, %246 : vector<2x32xf32>
    %255 = arith.addf %253, %254 : vector<2x32xf32>
    %256 = math.tanh %255 : vector<2x32xf32>
    %257 = arith.mulf %252, %256 : vector<2x32xf32>
    %258 = arith.mulf %257, %25 : vector<2x32xf32>
    %259 = arith.index_cast %c5_i32 : i32 to index
    %c0_120 = arith.constant 0 : index
    %c0_121 = arith.constant 0 : index
    %260 = vector.load %arg7[%259, %c0_120, %c0_121] : memref<8x2x32xf32, #tpu.memory_space<vmem>>, vector<1x2x32xf32>
    %261 = vector.shape_cast %260 : vector<1x2x32xf32> to vector<2x32xf32>
    %262 = vector.shape_cast %258 : vector<2x32xf32> to vector<1x2x32xf32>
    tpu.vector_store %arg7[%259, %c0_120, %c0_121], %262 {strides = array<i32>} : memref<8x2x32xf32, #tpu.memory_space<vmem>>, vector<1x2x32xf32>,
    %263 = arith.mulf %257, %24 : vector<2x32xf32>
    %c0_122 = arith.constant 0 : index
    %c0_123 = arith.constant 0 : index
    %264 = vector.load %arg11[%c0_122, %c0_123] : memref<2x32xf32, #tpu.memory_space<vmem>>, vector<2x32xf32>
    tpu.vector_store %arg11[%c0_122, %c0_123], %263 {strides = array<i32>} : memref<2x32xf32, #tpu.memory_space<vmem>>, vector<2x32xf32>,
    %c0_124 = arith.constant 0 : index
    %c0_125 = arith.constant 0 : index
    %265 = vector.load %arg12[%c0_124, %c0_125] : memref<2x32xf32, #tpu.memory_space<vmem>>, vector<2x32xf32>
    tpu.vector_store %arg12[%c0_124, %c0_125], %255 {strides = array<i32>} : memref<2x32xf32, #tpu.memory_space<vmem>>, vector<2x32xf32>,
    %c6_i32 = arith.constant 6 : i32
    %c0_126 = arith.constant 0 : index
    %c0_127 = arith.constant 0 : index
    %266 = vector.load %arg11[%c0_126, %c0_127] : memref<2x32xf32, #tpu.memory_space<vmem>>, vector<2x32xf32>
    %c0_128 = arith.constant 0 : index
    %c0_129 = arith.constant 0 : index
    %267 = vector.load %arg12[%c0_128, %c0_129] : memref<2x32xf32, #tpu.memory_space<vmem>>, vector<2x32xf32>
    %268 = arith.index_cast %c6_i32 : i32 to index
    %c0_130 = arith.constant 0 : index
    %c0_131 = arith.constant 0 : index
    %269 = vector.load %arg10[%268, %c0_130, %c0_131] : memref<8x2x128xf32, #tpu.memory_space<vmem>>, vector<1x2x128xf32>
    %270 = vector.shape_cast %269 : vector<1x2x128xf32> to vector<2x128xf32>
    %cst_132 = arith.constant dense<0.000000e+00> : vector<2x128xf32>
    %271 = tpu.matmul %266, %23, %cst_132 {dimension_numbers = #tpu.dot_dimension_numbers<[1], [0], [0], [1], [0, 0, 1, 1], [], []>} : vector<2x32xf32>, vector<32x128xf32>, vector<2x128xf32> -> vector<2x128xf32>
    %272 = arith.addf %270, %271 : vector<2x128xf32>
    %273 = vector.extract_strided_slice %272 {offsets = [0, 0], sizes = [2, 32], strides = [1, 1]} : vector<2x128xf32> to vector<2x32xf32>
    %274 = arith.negf %273 : vector<2x32xf32>
    %275 = math.exp %274 : vector<2x32xf32>
    %cst_133 = arith.constant 1.000000e+00 : f32
    %276 = vector.broadcast %cst_133 : f32 to vector<2x32xf32>
    %277 = arith.addf %276, %275 : vector<2x32xf32>
    %278 = arith.divf %276, %277 : vector<2x32xf32>
    %279 = vector.extract_strided_slice %272 {offsets = [0, 32], sizes = [2, 32], strides = [1, 1]} : vector<2x128xf32> to vector<2x32xf32>
    %280 = arith.negf %279 : vector<2x32xf32>
    %281 = math.exp %280 : vector<2x32xf32>
    %cst_134 = arith.constant 1.000000e+00 : f32
    %282 = vector.broadcast %cst_134 : f32 to vector<2x32xf32>
    %283 = arith.addf %282, %281 : vector<2x32xf32>
    %284 = arith.divf %282, %283 : vector<2x32xf32>
    %285 = vector.extract_strided_slice %272 {offsets = [0, 64], sizes = [2, 32], strides = [1, 1]} : vector<2x128xf32> to vector<2x32xf32>
    %286 = math.tanh %285 : vector<2x32xf32>
    %287 = vector.extract_strided_slice %272 {offsets = [0, 96], sizes = [2, 32], strides = [1, 1]} : vector<2x128xf32> to vector<2x32xf32>
    %288 = arith.negf %287 : vector<2x32xf32>
    %289 = math.exp %288 : vector<2x32xf32>
    %cst_135 = arith.constant 1.000000e+00 : f32
    %290 = vector.broadcast %cst_135 : f32 to vector<2x32xf32>
    %291 = arith.addf %290, %289 : vector<2x32xf32>
    %292 = arith.divf %290, %291 : vector<2x32xf32>
    %293 = arith.mulf %284, %267 : vector<2x32xf32>
    %294 = arith.mulf %278, %286 : vector<2x32xf32>
    %295 = arith.addf %293, %294 : vector<2x32xf32>
    %296 = math.tanh %295 : vector<2x32xf32>
    %297 = arith.mulf %292, %296 : vector<2x32xf32>
    %298 = arith.mulf %297, %25 : vector<2x32xf32>
    %299 = arith.index_cast %c6_i32 : i32 to index
    %c0_136 = arith.constant 0 : index
    %c0_137 = arith.constant 0 : index
    %300 = vector.load %arg7[%299, %c0_136, %c0_137] : memref<8x2x32xf32, #tpu.memory_space<vmem>>, vector<1x2x32xf32>
    %301 = vector.shape_cast %300 : vector<1x2x32xf32> to vector<2x32xf32>
    %302 = vector.shape_cast %298 : vector<2x32xf32> to vector<1x2x32xf32>
    tpu.vector_store %arg7[%299, %c0_136, %c0_137], %302 {strides = array<i32>} : memref<8x2x32xf32, #tpu.memory_space<vmem>>, vector<1x2x32xf32>,
    %303 = arith.mulf %297, %24 : vector<2x32xf32>
    %c0_138 = arith.constant 0 : index
    %c0_139 = arith.constant 0 : index
    %304 = vector.load %arg11[%c0_138, %c0_139] : memref<2x32xf32, #tpu.memory_space<vmem>>, vector<2x32xf32>
    tpu.vector_store %arg11[%c0_138, %c0_139], %303 {strides = array<i32>} : memref<2x32xf32, #tpu.memory_space<vmem>>, vector<2x32xf32>,
    %c0_140 = arith.constant 0 : index
    %c0_141 = arith.constant 0 : index
    %305 = vector.load %arg12[%c0_140, %c0_141] : memref<2x32xf32, #tpu.memory_space<vmem>>, vector<2x32xf32>
    tpu.vector_store %arg12[%c0_140, %c0_141], %295 {strides = array<i32>} : memref<2x32xf32, #tpu.memory_space<vmem>>, vector<2x32xf32>,
    %c7_i32 = arith.constant 7 : i32
    %c0_142 = arith.constant 0 : index
    %c0_143 = arith.constant 0 : index
    %306 = vector.load %arg11[%c0_142, %c0_143] : memref<2x32xf32, #tpu.memory_space<vmem>>, vector<2x32xf32>
    %c0_144 = arith.constant 0 : index
    %c0_145 = arith.constant 0 : index
    %307 = vector.load %arg12[%c0_144, %c0_145] : memref<2x32xf32, #tpu.memory_space<vmem>>, vector<2x32xf32>
    %308 = arith.index_cast %c7_i32 : i32 to index
    %c0_146 = arith.constant 0 : index
    %c0_147 = arith.constant 0 : index
    %309 = vector.load %arg10[%308, %c0_146, %c0_147] : memref<8x2x128xf32, #tpu.memory_space<vmem>>, vector<1x2x128xf32>
    %310 = vector.shape_cast %309 : vector<1x2x128xf32> to vector<2x128xf32>
    %cst_148 = arith.constant dense<0.000000e+00> : vector<2x128xf32>
    %311 = tpu.matmul %306, %23, %cst_148 {dimension_numbers = #tpu.dot_dimension_numbers<[1], [0], [0], [1], [0, 0, 1, 1], [], []>} : vector<2x32xf32>, vector<32x128xf32>, vector<2x128xf32> -> vector<2x128xf32>
    %312 = arith.addf %310, %311 : vector<2x128xf32>
    %313 = vector.extract_strided_slice %312 {offsets = [0, 0], sizes = [2, 32], strides = [1, 1]} : vector<2x128xf32> to vector<2x32xf32>
    %314 = arith.negf %313 : vector<2x32xf32>
    %315 = math.exp %314 : vector<2x32xf32>
    %cst_149 = arith.constant 1.000000e+00 : f32
    %316 = vector.broadcast %cst_149 : f32 to vector<2x32xf32>
    %317 = arith.addf %316, %315 : vector<2x32xf32>
    %318 = arith.divf %316, %317 : vector<2x32xf32>
    %319 = vector.extract_strided_slice %312 {offsets = [0, 32], sizes = [2, 32], strides = [1, 1]} : vector<2x128xf32> to vector<2x32xf32>
    %320 = arith.negf %319 : vector<2x32xf32>
    %321 = math.exp %320 : vector<2x32xf32>
    %cst_150 = arith.constant 1.000000e+00 : f32
    %322 = vector.broadcast %cst_150 : f32 to vector<2x32xf32>
    %323 = arith.addf %322, %321 : vector<2x32xf32>
    %324 = arith.divf %322, %323 : vector<2x32xf32>
    %325 = vector.extract_strided_slice %312 {offsets = [0, 64], sizes = [2, 32], strides = [1, 1]} : vector<2x128xf32> to vector<2x32xf32>
    %326 = math.tanh %325 : vector<2x32xf32>
    %327 = vector.extract_strided_slice %312 {offsets = [0, 96], sizes = [2, 32], strides = [1, 1]} : vector<2x128xf32> to vector<2x32xf32>
    %328 = arith.negf %327 : vector<2x32xf32>
    %329 = math.exp %328 : vector<2x32xf32>
    %cst_151 = arith.constant 1.000000e+00 : f32
    %330 = vector.broadcast %cst_151 : f32 to vector<2x32xf32>
    %331 = arith.addf %330, %329 : vector<2x32xf32>
    %332 = arith.divf %330, %331 : vector<2x32xf32>
    %333 = arith.mulf %324, %307 : vector<2x32xf32>
    %334 = arith.mulf %318, %326 : vector<2x32xf32>
    %335 = arith.addf %333, %334 : vector<2x32xf32>
    %336 = math.tanh %335 : vector<2x32xf32>
    %337 = arith.mulf %332, %336 : vector<2x32xf32>
    %338 = arith.mulf %337, %25 : vector<2x32xf32>
    %339 = arith.index_cast %c7_i32 : i32 to index
    %c0_152 = arith.constant 0 : index
    %c0_153 = arith.constant 0 : index
    %340 = vector.load %arg7[%339, %c0_152, %c0_153] : memref<8x2x32xf32, #tpu.memory_space<vmem>>, vector<1x2x32xf32>
    %341 = vector.shape_cast %340 : vector<1x2x32xf32> to vector<2x32xf32>
    %342 = vector.shape_cast %338 : vector<2x32xf32> to vector<1x2x32xf32>
    tpu.vector_store %arg7[%339, %c0_152, %c0_153], %342 {strides = array<i32>} : memref<8x2x32xf32, #tpu.memory_space<vmem>>, vector<1x2x32xf32>,
    %343 = arith.mulf %337, %24 : vector<2x32xf32>
    %c0_154 = arith.constant 0 : index
    %c0_155 = arith.constant 0 : index
    %344 = vector.load %arg11[%c0_154, %c0_155] : memref<2x32xf32, #tpu.memory_space<vmem>>, vector<2x32xf32>
    tpu.vector_store %arg11[%c0_154, %c0_155], %343 {strides = array<i32>} : memref<2x32xf32, #tpu.memory_space<vmem>>, vector<2x32xf32>,
    %c0_156 = arith.constant 0 : index
    %c0_157 = arith.constant 0 : index
    %345 = vector.load %arg12[%c0_156, %c0_157] : memref<2x32xf32, #tpu.memory_space<vmem>>, vector<2x32xf32>
    tpu.vector_store %arg12[%c0_156, %c0_157], %335 {strides = array<i32>} : memref<2x32xf32, #tpu.memory_space<vmem>>, vector<2x32xf32>,
    %c8_i32 = arith.constant 8 : i32
    %c0_158 = arith.constant 0 : index
    %c0_159 = arith.constant 0 : index
    %346 = vector.load %arg11[%c0_158, %c0_159] : memref<2x32xf32, #tpu.memory_space<vmem>>, vector<2x32xf32>
    %c0_160 = arith.constant 0 : index
    %c0_161 = arith.constant 0 : index
    %347 = vector.load %arg8[%c0_160, %c0_161] : memref<2x32xf32, #tpu.memory_space<vmem>>, vector<2x32xf32>
    tpu.vector_store %arg8[%c0_160, %c0_161], %346 {strides = array<i32>} : memref<2x32xf32, #tpu.memory_space<vmem>>, vector<2x32xf32>,
    %c0_162 = arith.constant 0 : index
    %c0_163 = arith.constant 0 : index
    %348 = vector.load %arg12[%c0_162, %c0_163] : memref<2x32xf32, #tpu.memory_space<vmem>>, vector<2x32xf32>
    %c0_164 = arith.constant 0 : index
    %c0_165 = arith.constant 0 : index
    %349 = vector.load %arg9[%c0_164, %c0_165] : memref<2x32xf32, #tpu.memory_space<vmem>>, vector<2x32xf32>
    tpu.vector_store %arg9[%c0_164, %c0_165], %348 {strides = array<i32>} : memref<2x32xf32, #tpu.memory_space<vmem>>, vector<2x32xf32>,
    return
  }
}

</mosaic_0001>

<llo_original>
// kernel: tpu_custom_call.1
$region0: #{tpu_custom_call.1}
  #allocation0 [shape = 'u32[]', space=smem, size = 0x4, offset = 0x4, fixed_abs, tag = 'smem constant byte address 0x4 - core index']
  #allocation1 [shape = 'u32[144,128]{1,0:T(1,128)}', space=vmem, size = 0x12000, scoped, tag = 'internal scratch']
  #allocation2 [shape = 'f32[8,2,128]{2,1,0:T(2,128)}', space=vmem, size = 0x2000, scoped, tag = 'scratch operand']
  #allocation3 [shape = 'f32[2,32]{1,0:T(2,128)}', space=vmem, size = 0x400, scoped, tag = 'scratch operand']
  #allocation4 [shape = 'f32[2,32]{1,0:T(2,128)}', space=vmem, size = 0x400, scoped, tag = 'scratch operand']
  %s0 = inlined_call_operand.hbm [shape: f32[8,2,16], index: 0, kind: input, shape index: {}]
  %s1 = inlined_call_operand.hbm [shape: f32[16,128], index: 1, kind: input, shape index: {}]
  %s2 = inlined_call_operand.hbm [shape: f32[32,128], index: 2, kind: input, shape index: {}]
  %s3 = inlined_call_operand.vmem [shape: f32[1,128], index: 3, kind: input, shape index: {}]
  %s4 = inlined_call_operand.vmem [shape: f32[2,16], index: 4, kind: input, shape index: {}]
  %s5 = inlined_call_operand.vmem [shape: f32[2,32], index: 5, kind: input, shape index: {}]
  %s6 = inlined_call_operand.vmem [shape: f32[2,32], index: 6, kind: input, shape index: {}]
  %s7 = inlined_call_operand.hbm [shape: f32[8,2,32], index: 7, kind: output, shape index: {0}]
  %s8 = inlined_call_operand.hbm [shape: f32[2,32], index: 8, kind: output, shape index: {1}]
  %s9 = inlined_call_operand.hbm [shape: f32[2,32], index: 9, kind: output, shape index: {2}]
  %10 = xla_tuple %s7, %s8, %s9
  %s11 = sld [smem:[#allocation0]]
  $region66: #{tpu_custom_call.1} parent=0
    _
  %s13 = ssub.s32 1, %s11
  %s14 = scalar_select 0, %s13, %s11
  $region1: #{tpu_custom_call.1} parent=0
    #allocation5 [shape = 'u8[8192]{0}', space=vmem, size = 0x2000, scoped, tag = 'input window, operand 0, single buffered']
    #allocation6 [shape = 's32[1]{0}', space=sflag, size = 0x4, scoped, tag = 'scoped memory for tpu_custom_call.1']
    #allocation7 [shape = 's32[1]{0}', space=sflag, size = 0x4, scoped, tag = 'scoped memory for tpu_custom_call.1']
    #allocation8 [shape = 'u8[8192]{0}', space=vmem, size = 0x2000, scoped, tag = 'input window, operand 1, single buffered']
    #allocation9 [shape = 's32[1]{0}', space=sflag, size = 0x4, scoped, tag = 'scoped memory for tpu_custom_call.1']
    #allocation10 [shape = 'u8[16384]{0}', space=vmem, size = 0x4000, scoped, tag = 'input window, operand 2, single buffered']
    #allocation11 [shape = 'u8[8192]{0}', space=vmem, size = 0x2000, scoped, tag = 'output window, operand 0, single buffered']
    #allocation12 [shape = 'u8[1024]{0}', space=vmem, size = 0x400, scoped, tag = 'output window, operand 1, single buffered']
    #allocation13 [shape = 's32[1]{0}', space=sflag, size = 0x4, scoped, tag = 'scoped memory for tpu_custom_call.1']
    #allocation14 [shape = 'u8[1024]{0}', space=vmem, size = 0x400, scoped, tag = 'output window, operand 2, single buffered']
    %15 = vsyncpa [#allocation6], 0
    %16 = vsyncpa [#allocation9], 0
    %17 = vsyncpa [#allocation7], 0
    %18 = vsyncpa [#allocation13], 0
    // Predicated region
    $region2: #{tpu_custom_call.1} parent=1 // pred_check
      _
    $region3: #{tpu_custom_call.1} parent=1 // pred_check_branch
      %20 = sbr.rel (0) target = $region5
    $region4: #{tpu_custom_call.1} parent=1 // pred_region
      %s22 = ssub.s32 256, 256
      %23 = vsyncadd [#allocation6], %s22
      %s24 = sshll.u32 [#allocation5], 4
      %s25 = int_to_ptr.vmem [resolvable:$true] %s24
      %30 = dma.hbm_to_vmem [thread:$0]  %s0, 256, %s25, [#allocation6], 32, 32, 2
    $region5: #{tpu_custom_call.1} parent=1 // pred_fallthru
      _
    // Predicated region
    $region6: #{tpu_custom_call.1} parent=1 // pred_check
      _
    $region7: #{tpu_custom_call.1} parent=1 // pred_check_branch
      %32 = sbr.rel (0) target = $region9
    $region8: #{tpu_custom_call.1} parent=1 // pred_region
      %s34 = ssub.s32 256, 256
      %35 = vsyncadd [#allocation9], %s34
      %s36 = sshll.u32 [#allocation8], 4
      %s37 = int_to_ptr.vmem [resolvable:$true] %s36
      %42 = dma.hbm_to_vmem [thread:$0]  %s1, 256, %s37, [#allocation9], 128, 128, 8
    $region9: #{tpu_custom_call.1} parent=1 // pred_fallthru
      _
    // Predicated region
    $region10: #{tpu_custom_call.1} parent=1 // pred_check
      _
    $region11: #{tpu_custom_call.1} parent=1 // pred_check_branch
      %44 = sbr.rel (0) target = $region13
    $region12: #{tpu_custom_call.1} parent=1 // pred_region
      %s46 = ssub.s32 512, 512
      %47 = vsyncadd [#allocation9], %s46
      %s48 = sshll.u32 [#allocation10], 4
      %s49 = int_to_ptr.vmem [resolvable:$true] %s48
      %54 = dma.hbm_to_vmem [thread:$0]  %s2, 512, %s49, [#allocation9], 128, 128, 8
    $region13: #{tpu_custom_call.1} parent=1 // pred_fallthru
      _
    // Predicated region
    $region14: #{tpu_custom_call.1} parent=1 // pred_check
      _
    $region15: #{tpu_custom_call.1} parent=1 // pred_check_branch
      %56 = sbr.rel (0) target = $region17
    $region16: #{tpu_custom_call.1} parent=1 // pred_region
      _
    $region17: #{tpu_custom_call.1} parent=1 // pred_fallthru
      _
    // Predicated region
    $region18: #{tpu_custom_call.1} parent=1 // pred_check
      _
    $region19: #{tpu_custom_call.1} parent=1 // pred_check_branch
      %58 = sbr.rel (0) target = $region21
    $region20: #{tpu_custom_call.1} parent=1 // pred_region
      _
    $region21: #{tpu_custom_call.1} parent=1 // pred_fallthru
      _
    // Predicated region
    $region22: #{tpu_custom_call.1} parent=1 // pred_check
      _
    $region23: #{tpu_custom_call.1} parent=1 // pred_check_branch
      %60 = sbr.rel (0) target = $region25
    $region24: #{tpu_custom_call.1} parent=1 // pred_region
      _
    $region25: #{tpu_custom_call.1} parent=1 // pred_fallthru
      _
    // Predicated region
    $region26: #{tpu_custom_call.1} parent=1 // pred_check
      _
    $region27: #{tpu_custom_call.1} parent=1 // pred_check_branch
      %62 = sbr.rel (0) target = $region29
    $region28: #{tpu_custom_call.1} parent=1 // pred_region
      _
    $region29: #{tpu_custom_call.1} parent=1 // pred_fallthru
      _
    // Predicated region
    $region30: #{tpu_custom_call.1} parent=1 // pred_check
      _
    $region31: #{tpu_custom_call.1} parent=1 // pred_check_branch
      %64 = sbr.rel (0) target = $region33
    $region32: #{tpu_custom_call.1} parent=1 // pred_region
      %65 = dma.done [#allocation6], 256
    $region33: #{tpu_custom_call.1} parent=1 // pred_fallthru
      _
    // Predicated region
    $region34: #{tpu_custom_call.1} parent=1 // pred_check
      _
    $region35: #{tpu_custom_call.1} parent=1 // pred_check_branch
      %67 = sbr.rel (0) target = $region37
    $region36: #{tpu_custom_call.1} parent=1 // pred_region
      %68 = dma.done [#allocation9], 256
    $region37: #{tpu_custom_call.1} parent=1 // pred_fallthru
      _
    // Predicated region
    $region38: #{tpu_custom_call.1} parent=1 // pred_check
      _
    $region39: #{tpu_custom_call.1} parent=1 // pred_check_branch
      %70 = sbr.rel (0) target = $region41
    $region40: #{tpu_custom_call.1} parent=1 // pred_region
      %71 = dma.done [#allocation9], 512
    $region41: #{tpu_custom_call.1} parent=1 // pred_fallthru
      _
    %v72 = vld [vmem:[#allocation8] sm:$0xff]
    %v73 = vld [vmem:[#allocation8 + $0x8] sm:$0xff]
    %v74 = vld [vmem:[%s3] sm:$0x1]
    %v75 = vld [vmem:[#allocation5] sm:$0x3]
    %v76 = vld [vmem:[#allocation5 + $0x2] sm:$0x3]
    %v77 = vld [vmem:[#allocation5 + $0x4] sm:$0x3]
    %v78 = vld [vmem:[#allocation5 + $0x6] sm:$0x3]
    %v79 = vld [vmem:[#allocation5 + $0x8] sm:$0x3]
    %v80 = vld [vmem:[#allocation5 + $0xa] sm:$0x3]
    %v81 = vld [vmem:[#allocation5 + $0xc] sm:$0x3]
    %v82 = vld [vmem:[#allocation5 + $0xe] sm:$0x3]
    %v84 = vlaneseq
    %v85 = vshrl.u32 %v84, 7
    %v86 = vsub.s32 0, %v85
    %v87 = vrot.slane %v74, %v86
    %v97 = vcombine.low %v75, %v76
    %v98 = vcombine.low %v77, %v78
    %v100 = vunpack.c.l.s4 1983009808
    %v101 = vunpack.c.0.s8 %v100
    %v102 = vlaneseq
    %v103 = vshrl.u32 %v102, 7
    %v104 = vsub.s32 %v101, %v103
    %v105 = vrot.slane %v97, %v104
    %v107 = vunpack.c.l.s4 1983009808
    %v108 = vunpack.c.0.s8 %v107
    %v109 = vlaneseq
    %v110 = vshrl.u32 %v109, 7
    %v111 = vsub.s32 %v108, %v110
    %v112 = vrot.slane %v98, %v111
    %v113 = vcombine.low %v105, %v112
    %v114 = vcombine.low %v79, %v80
    %v115 = vcombine.low %v81, %v82
    %v117 = vunpack.c.l.s4 1983009808
    %v118 = vunpack.c.0.s8 %v117
    %v119 = vlaneseq
    %v120 = vshrl.u32 %v119, 7
    %v121 = vsub.s32 %v118, %v120
    %v122 = vrot.slane %v114, %v121
    %v124 = vunpack.c.l.s4 1983009808
    %v125 = vunpack.c.0.s8 %v124
    %v126 = vlaneseq
    %v127 = vshrl.u32 %v126, 7
    %v128 = vsub.s32 %v125, %v127
    %v129 = vrot.slane %v115, %v128
    %v130 = vcombine.low %v122, %v129
    %vm131 = vcmask 130048
    %v132 = vsel %vm131, %v113, 0
    %v134 = vsel %vm131, %v130, 0
    %136 = vmatprep.subr.mxu0 0.0
    %137 = vmatpush1.msra.mxu0 0.0
    %138 = vmatprep.subr.mxu0 0.0
    %139 = vmatpush1.msra.mxu0 0.0
    %140 = vmatprep.subr.mxu0 0.0
    %141 = vmatpush1.msra.mxu0 0.0
    %142 = vmatprep.subr.mxu0 0.0
    %143 = vmatpush1.msra.mxu0 0.0
    %144 = vmatprep.subr.mxu0 0.0
    %145 = vmatpush1.msra.mxu0 0.0
    %146 = vmatprep.subr.mxu0 0.0
    %147 = vmatpush1.msra.mxu0 0.0
    %148 = vmatprep.subr.mxu0 0.0
    %149 = vmatpush1.msra.mxu0 0.0
    %150 = vmatprep.subr.mxu0 0.0
    %151 = vmatpush1.msra.mxu0 0.0
    %152 = vmatprep.subr.mxu0 0.0
    %153 = vmatpush1.msra.mxu0 0.0
    %154 = vmatprep.subr.mxu0 0.0
    %155 = vmatpush1.msra.mxu0 0.0
    %156 = vmatprep.subr.mxu0 0.0
    %157 = vmatpush1.msra.mxu0 0.0
    %158 = vmatprep.subr.mxu0 0.0
    %159 = vmatpush1.msra.mxu0 0.0
    %160 = vmatprep.subr.mxu0 0.0
    %161 = vmatpush1.msra.mxu0 0.0
    %162 = vmatprep.subr.mxu0 0.0
    %163 = vmatpush1.msra.mxu0 0.0
    %164 = vmatprep.subr.mxu0 0.0
    %165 = vmatpush1.msra.mxu0 %v73
    %166 = vmatprep.subr.mxu0 0.0
    %167 = vmatpush1.msra.mxu0 %v72
    %168 = vmatprep.subr.mxu0 0.0
    %169 = vmatpush2.msra.mxu0 0.0
    %170 = vmatprep.subr.mxu0 0.0
    %171 = vmatpush2.msra.mxu0 0.0
    %172 = vmatprep.subr.mxu0 0.0
    %173 = vmatpush2.msra.mxu0 0.0
    %174 = vmatprep.subr.mxu0 0.0
    %175 = vmatpush2.msra.mxu0 0.0
    %176 = vmatprep.subr.mxu0 0.0
    %177 = vmatpush2.msra.mxu0 0.0
    %178 = vmatprep.subr.mxu0 0.0
    %179 = vmatpush2.msra.mxu0 0.0
    %180 = vmatprep.subr.mxu0 0.0
    %181 = vmatpush2.msra.mxu0 0.0
    %182 = vmatprep.subr.mxu0 0.0
    %183 = vmatpush2.msra.mxu0 0.0
    %184 = vmatprep.subr.mxu0 0.0
    %185 = vmatpush2.msra.mxu0 0.0
    %186 = vmatprep.subr.mxu0 0.0
    %187 = vmatpush2.msra.mxu0 0.0
    %188 = vmatprep.subr.mxu0 0.0
    %189 = vmatpush2.msra.mxu0 0.0
    %190 = vmatprep.subr.mxu0 0.0
    %191 = vmatpush2.msra.mxu0 0.0
    %192 = vmatprep.subr.mxu0 0.0
    %193 = vmatpush2.msra.mxu0 0.0
    %194 = vmatprep.subr.mxu0 0.0
    %195 = vmatpush2.msra.mxu0 0.0
    %196 = vmatprep.subr.mxu0 0.0
    %197 = vmatpush2.msra.mxu0 0.0
    %198 = vmatprep.subr.mxu0 0.0
    %199 = vmatpush2.msra.mxu0 0.0
    %200 = vmatprep.mubr.f32.mxu0 0.0
    %201 = vmatmul.mubr.f32.gmra.mxu0 %v132
    %v202 = vpop.f32.mrf.mxu0
    %v203 = vadd.f32 %v87, %v202
    %v204 = vpop.f32.mrf.mxu0
    %205 = vmatprep.mubr.f32.mxu0 0.0
    %206 = vmatmul.mubr.f32.gmra.mxu0 %v134
    %v207 = vpop.f32.mrf.mxu0
    %v208 = vadd.f32 %v87, %v207
    %v209 = vpop.f32.mrf.mxu0
    %210 = vdwg.mxu0
    %v213 = vcombine.high %v203, %v203
    %v215 = vunpack.c.l.s4 1983009808
    %v216 = vunpack.c.0.s8 %v215
    %v217 = vlaneseq
    %v218 = vshrl.u32 %v217, 7
    %v219 = vsub.s32 %v216, %v218
    %v220 = vrot.slane %v203, %v219
    %v222 = vunpack.c.l.s4 1983009808
    %v223 = vunpack.c.0.s8 %v222
    %v224 = vlaneseq
    %v225 = vshrl.u32 %v224, 7
    %v226 = vsub.s32 %v223, %v225
    %v227 = vrot.slane %v213, %v226
    %v228 = vcombine.high %v220, %v220
    %v229 = vcombine.high %v227, %v227
    %v230 = vcombine.high %v208, %v208
    %v232 = vunpack.c.l.s4 1983009808
    %v233 = vunpack.c.0.s8 %v232
    %v234 = vlaneseq
    %v235 = vshrl.u32 %v234, 7
    %v236 = vsub.s32 %v233, %v235
    %v237 = vrot.slane %v208, %v236
    %v239 = vunpack.c.l.s4 1983009808
    %v240 = vunpack.c.0.s8 %v239
    %v241 = vlaneseq
    %v242 = vshrl.u32 %v241, 7
    %v243 = vsub.s32 %v240, %v242
    %v244 = vrot.slane %v230, %v243
    %v245 = vcombine.high %v237, %v237
    %v246 = vcombine.high %v244, %v244
    %255 = vst [vmem:[#allocation2] sm:$0x3] %v220
    %256 = vst [vmem:[#allocation2 + $0x2] sm:$0x3] %v228
    %257 = vst [vmem:[#allocation2 + $0x4] sm:$0x3] %v227
    %258 = vst [vmem:[#allocation2 + $0x6] sm:$0x3] %v229
    %259 = vst [vmem:[#allocation2 + $0x8] sm:$0x3] %v237
    %260 = vst [vmem:[#allocation2 + $0xa] sm:$0x3] %v245
    %261 = vst [vmem:[#allocation2 + $0xc] sm:$0x3] %v244
    %262 = vst [vmem:[#allocation2 + $0xe] sm:$0x3] %v246
    %v263 = vld [vmem:[#allocation5] sm:$0x3]
    %v264 = vld [vmem:[%s4] sm:$0x3]
    %v265 = vmul.f32 %v263, %v264
    %v267 = vsel %vm131, %v265, 0
    %269 = vmatprep.subr.mxu0 0.0
    %270 = vmatpush1.msra.mxu0 0.0
    %271 = vmatprep.subr.mxu0 0.0
    %272 = vmatpush1.msra.mxu0 0.0
    %273 = vmatprep.subr.mxu0 0.0
    %274 = vmatpush1.msra.mxu0 0.0
    %275 = vmatprep.subr.mxu0 0.0
    %276 = vmatpush1.msra.mxu0 0.0
    %277 = vmatprep.subr.mxu0 0.0
    %278 = vmatpush1.msra.mxu0 0.0
    %279 = vmatprep.subr.mxu0 0.0
    %280 = vmatpush1.msra.mxu0 0.0
    %281 = vmatprep.subr.mxu0 0.0
    %282 = vmatpush1.msra.mxu0 0.0
    %283 = vmatprep.subr.mxu0 0.0
    %284 = vmatpush1.msra.mxu0 0.0
    %285 = vmatprep.subr.mxu0 0.0
    %286 = vmatpush1.msra.mxu0 0.0
    %287 = vmatprep.subr.mxu0 0.0
    %288 = vmatpush1.msra.mxu0 0.0
    %289 = vmatprep.subr.mxu0 0.0
    %290 = vmatpush1.msra.mxu0 0.0
    %291 = vmatprep.subr.mxu0 0.0
    %292 = vmatpush1.msra.mxu0 0.0
    %293 = vmatprep.subr.mxu0 0.0
    %294 = vmatpush1.msra.mxu0 0.0
    %295 = vmatprep.subr.mxu0 0.0
    %296 = vmatpush1.msra.mxu0 0.0
    %297 = vmatprep.subr.mxu0 0.0
    %298 = vmatpush1.msra.mxu0 %v73
    %299 = vmatprep.subr.mxu0 0.0
    %300 = vmatpush1.msra.mxu0 %v72
    %301 = vmatprep.subr.mxu0 0.0
    %302 = vmatpush2.msra.mxu0 0.0
    %303 = vmatprep.subr.mxu0 0.0
    %304 = vmatpush2.msra.mxu0 0.0
    %305 = vmatprep.subr.mxu0 0.0
    %306 = vmatpush2.msra.mxu0 0.0
    %307 = vmatprep.subr.mxu0 0.0
    %308 = vmatpush2.msra.mxu0 0.0
    %309 = vmatprep.subr.mxu0 0.0
    %310 = vmatpush2.msra.mxu0 0.0
    %311 = vmatprep.subr.mxu0 0.0
    %312 = vmatpush2.msra.mxu0 0.0
    %313 = vmatprep.subr.mxu0 0.0
    %314 = vmatpush2.msra.mxu0 0.0
    %315 = vmatprep.subr.mxu0 0.0
    %316 = vmatpush2.msra.mxu0 0.0
    %317 = vmatprep.subr.mxu0 0.0
    %318 = vmatpush2.msra.mxu0 0.0
    %319 = vmatprep.subr.mxu0 0.0
    %320 = vmatpush2.msra.mxu0 0.0
    %321 = vmatprep.subr.mxu0 0.0
    %322 = vmatpush2.msra.mxu0 0.0
    %323 = vmatprep.subr.mxu0 0.0
    %324 = vmatpush2.msra.mxu0 0.0
    %325 = vmatprep.subr.mxu0 0.0
    %326 = vmatpush2.msra.mxu0 0.0
    %327 = vmatprep.subr.mxu0 0.0
    %328 = vmatpush2.msra.mxu0 0.0
    %329 = vmatprep.subr.mxu0 0.0
    %330 = vmatpush2.msra.mxu0 0.0
    %331 = vmatprep.subr.mxu0 0.0
    %332 = vmatpush2.msra.mxu0 0.0
    %333 = vmatprep.mubr.f32.mxu0 0.0
    %334 = vmatmul.mubr.f32.gmra.mxu0 %v267
    %v335 = vpop.f32.mrf.mxu0
    %v336 = vadd.f32 %v87, %v335
    %v337 = vpop.f32.mrf.mxu0
    %338 = vdwg.mxu0
    %339 = vst [vmem:[#allocation2] sm:$0x3] %v336
    %vm340 = vcmask 254976
    %341 = vst.msk [vmem:[#allocation3] sm:$0x3] %vm340, 0.0
    %342 = vst.msk [vmem:[#allocation4] sm:$0x3] %vm340, 0.0
    %v343 = vld [vmem:[#allocation10] sm:$0xff]
    %v344 = vld [vmem:[#allocation10 + $0x8] sm:$0xff]
    %v345 = vld [vmem:[#allocation10 + $0x10] sm:$0xff]
    %v346 = vld [vmem:[#allocation10 + $0x18] sm:$0xff]
    %v347 = vld [vmem:[%s5] sm:$0x3]
    %v348 = vld [vmem:[%s6] sm:$0x3]
    %v349 = vld [vmem:[#allocation3] sm:$0x3]
    %v350 = vld [vmem:[#allocation4] sm:$0x3]
    %v351 = vld [vmem:[#allocation2] sm:$0x3]
    %vm352 = vcmask 261120
    %v354 = vsel %vm352, %v349, 0
    %356 = vmatprep.subr.mxu0 0.0
    %357 = vmatpush1.msra.mxu0 0.0
    %358 = vmatprep.subr.mxu0 0.0
    %359 = vmatpush1.msra.mxu0 0.0
    %360 = vmatprep.subr.mxu0 0.0
    %361 = vmatpush1.msra.mxu0 0.0
    %362 = vmatprep.subr.mxu0 0.0
    %363 = vmatpush1.msra.mxu0 0.0
    %364 = vmatprep.subr.mxu0 0.0
    %365 = vmatpush1.msra.mxu0 0.0
    %366 = vmatprep.subr.mxu0 0.0
    %367 = vmatpush1.msra.mxu0 0.0
    %368 = vmatprep.subr.mxu0 0.0
    %369 = vmatpush1.msra.mxu0 0.0
    %370 = vmatprep.subr.mxu0 0.0
    %371 = vmatpush1.msra.mxu0 0.0
    %372 = vmatprep.subr.mxu0 0.0
    %373 = vmatpush1.msra.mxu0 0.0
    %374 = vmatprep.subr.mxu0 0.0
    %375 = vmatpush1.msra.mxu0 0.0
    %376 = vmatprep.subr.mxu0 0.0
    %377 = vmatpush1.msra.mxu0 0.0
    %378 = vmatprep.subr.mxu0 0.0
    %379 = vmatpush1.msra.mxu0 0.0
    %380 = vmatprep.subr.mxu0 0.0
    %381 = vmatpush1.msra.mxu0 %v346
    %382 = vmatprep.subr.mxu0 0.0
    %383 = vmatpush1.msra.mxu0 %v345
    %384 = vmatprep.subr.mxu0 0.0
    %385 = vmatpush1.msra.mxu0 %v344
    %386 = vmatprep.subr.mxu0 0.0
    %387 = vmatpush1.msra.mxu0 %v343
    %388 = vmatprep.subr.mxu0 0.0
    %389 = vmatpush2.msra.mxu0 0.0
    %390 = vmatprep.subr.mxu0 0.0
    %391 = vmatpush2.msra.mxu0 0.0
    %392 = vmatprep.subr.mxu0 0.0
    %393 = vmatpush2.msra.mxu0 0.0
    %394 = vmatprep.subr.mxu0 0.0
    %395 = vmatpush2.msra.mxu0 0.0
    %396 = vmatprep.subr.mxu0 0.0
    %397 = vmatpush2.msra.mxu0 0.0
    %398 = vmatprep.subr.mxu0 0.0
    %399 = vmatpush2.msra.mxu0 0.0
    %400 = vmatprep.subr.mxu0 0.0
    %401 = vmatpush2.msra.mxu0 0.0
    %402 = vmatprep.subr.mxu0 0.0
    %403 = vmatpush2.msra.mxu0 0.0
    %404 = vmatprep.subr.mxu0 0.0
    %405 = vmatpush2.msra.mxu0 0.0
    %406 = vmatprep.subr.mxu0 0.0
    %407 = vmatpush2.msra.mxu0 0.0
    %408 = vmatprep.subr.mxu0 0.0
    %409 = vmatpush2.msra.mxu0 0.0
    %410 = vmatprep.subr.mxu0 0.0
    %411 = vmatpush2.msra.mxu0 0.0
    %412 = vmatprep.subr.mxu0 0.0
    %413 = vmatpush2.msra.mxu0 0.0
    %414 = vmatprep.subr.mxu0 0.0
    %415 = vmatpush2.msra.mxu0 0.0
    %416 = vmatprep.subr.mxu0 0.0
    %417 = vmatpush2.msra.mxu0 0.0
    %418 = vmatprep.subr.mxu0 0.0
    %419 = vmatpush2.msra.mxu0 0.0
    %420 = vmatprep.mubr.f32.mxu0 0.0
    %421 = vmatmul.mubr.f32.gmra.mxu0 %v354
    %v422 = vpop.f32.mrf.mxu0
    %v423 = vadd.f32 0.0, %v422
    %v424 = vpop.f32.mrf.mxu0
    %425 = vdwg.mxu0
    %v426 = vadd.f32 %v351, %v423
    %v427 = vxor.u32 %v426, 2147483648
    %v428 = vmul.f32 %v427, 1.442695
    %v429 = vpow.pop %v428
    %v430 = vadd.f32 %v429, 1.0
    %v431 = vrcp.pop %v430
    %v432 = vmul.f32 1.0, %v431
    %v433 = vtanh.pop %v426
    %435 = vrot.lane.b32.xlu0 %v350, 32
    %v436 = vpop.permute.xlu0 %435
    %v438 = vmul.f32 %v432, %v436
    %440 = vrot.lane.b32.xlu0 %v433, 64
    %v441 = vpop.permute.xlu0 %440
    %v443 = vmul.f32 %v432, %v441
    %445 = vrot.lane.b32.xlu0 %v443, 32
    %v446 = vpop.permute.xlu0 %445
    %v448 = vadd.f32 %v438, %v446
    %v449 = vtanh.pop %v448
    %451 = vrot.lane.b32.xlu0 %v449, 64
    %v452 = vpop.permute.xlu0 %451
    %v454 = vmul.f32 %v432, %v452
    %456 = vrot.lane.b32.xlu0 %v348, 96
    %v457 = vpop.permute.xlu0 %456
    %v459 = vmul.f32 %v454, %v457
    %461 = vrot.lane.b32.xlu0 %v459, 32
    %v462 = vpop.permute.xlu0 %461
    %464 = vst.msk [vmem:[#allocation11] sm:$0x3] %vm340, %v462
    %466 = vrot.lane.b32.xlu0 %v347, 96
    %v467 = vpop.permute.xlu0 %466
    %v469 = vmul.f32 %v454, %v467
    %471 = vrot.lane.b32.xlu0 %v469, 32
    %v472 = vpop.permute.xlu0 %471
    %474 = vst.msk [vmem:[#allocation3] sm:$0x3] %vm340, %v472
    %476 = vrot.lane.b32.xlu0 %v448, 96
    %v477 = vpop.permute.xlu0 %476
    %479 = vst.msk [vmem:[#allocation4] sm:$0x3] %vm340, %v477
    %v480 = vld [vmem:[#allocation3] sm:$0x3]
    %v481 = vld [vmem:[#allocation4] sm:$0x3]
    %s482 = scalar_lea.vmem [#allocation2], 2
    %v483 = vld [vmem:[%s482] sm:$0x3]
    %v485 = vsel %vm352, %v480, 0
    %487 = vmatprep.subr.mxu0 0.0
    %488 = vmatpush1.msra.mxu0 0.0
    %489 = vmatprep.subr.mxu0 0.0
    %490 = vmatpush1.msra.mxu0 0.0
    %491 = vmatprep.subr.mxu0 0.0
    %492 = vmatpush1.msra.mxu0 0.0
    %493 = vmatprep.subr.mxu0 0.0
    %494 = vmatpush1.msra.mxu0 0.0
    %495 = vmatprep.subr.mxu0 0.0
    %496 = vmatpush1.msra.mxu0 0.0
    %497 = vmatprep.subr.mxu0 0.0
    %498 = vmatpush1.msra.mxu0 0.0
    %499 = vmatprep.subr.mxu0 0.0
    %500 = vmatpush1.msra.mxu0 0.0
    %501 = vmatprep.subr.mxu0 0.0
    %502 = vmatpush1.msra.mxu0 0.0
    %503 = vmatprep.subr.mxu0 0.0
    %504 = vmatpush1.msra.mxu0 0.0
    %505 = vmatprep.subr.mxu0 0.0
    %506 = vmatpush1.msra.mxu0 0.0
    %507 = vmatprep.subr.mxu0 0.0
    %508 = vmatpush1.msra.mxu0 0.0
    %509 = vmatprep.subr.mxu0 0.0
    %510 = vmatpush1.msra.mxu0 0.0
    %511 = vmatprep.subr.mxu0 0.0
    %512 = vmatpush1.msra.mxu0 %v346
    %513 = vmatprep.subr.mxu0 0.0
    %514 = vmatpush1.msra.mxu0 %v345
    %515 = vmatprep.subr.mxu0 0.0
    %516 = vmatpush1.msra.mxu0 %v344
    %517 = vmatprep.subr.mxu0 0.0
    %518 = vmatpush1.msra.mxu0 %v343
    %519 = vmatprep.subr.mxu0 0.0
    %520 = vmatpush2.msra.mxu0 0.0
    %521 = vmatprep.subr.mxu0 0.0
    %522 = vmatpush2.msra.mxu0 0.0
    %523 = vmatprep.subr.mxu0 0.0
    %524 = vmatpush2.msra.mxu0 0.0
    %525 = vmatprep.subr.mxu0 0.0
    %526 = vmatpush2.msra.mxu0 0.0
    %527 = vmatprep.subr.mxu0 0.0
    %528 = vmatpush2.msra.mxu0 0.0
    %529 = vmatprep.subr.mxu0 0.0
    %530 = vmatpush2.msra.mxu0 0.0
    %531 = vmatprep.subr.mxu0 0.0
    %532 = vmatpush2.msra.mxu0 0.0
    %533 = vmatprep.subr.mxu0 0.0
    %534 = vmatpush2.msra.mxu0 0.0
    %535 = vmatprep.subr.mxu0 0.0
    %536 = vmatpush2.msra.mxu0 0.0
    %537 = vmatprep.subr.mxu0 0.0
    %538 = vmatpush2.msra.mxu0 0.0
    %539 = vmatprep.subr.mxu0 0.0
    %540 = vmatpush2.msra.mxu0 0.0
    %541 = vmatprep.subr.mxu0 0.0
    %542 = vmatpush2.msra.mxu0 0.0
    %543 = vmatprep.subr.mxu0 0.0
    %544 = vmatpush2.msra.mxu0 0.0
    %545 = vmatprep.subr.mxu0 0.0
    %546 = vmatpush2.msra.mxu0 0.0
    %547 = vmatprep.subr.mxu0 0.0
    %548 = vmatpush2.msra.mxu0 0.0
    %549 = vmatprep.subr.mxu0 0.0
    %550 = vmatpush2.msra.mxu0 0.0
    %551 = vmatprep.mubr.f32.mxu0 0.0
    %552 = vmatmul.mubr.f32.gmra.mxu0 %v485
    %v553 = vpop.f32.mrf.mxu0
    %v554 = vadd.f32 0.0, %v553
    %v555 = vpop.f32.mrf.mxu0
    %556 = vdwg.mxu0
    %v557 = vadd.f32 %v483, %v554
    %v558 = vxor.u32 %v557, 2147483648
    %v559 = vmul.f32 %v558, 1.442695
    %v560 = vpow.pop %v559
    %v561 = vadd.f32 %v560, 1.0
    %v562 = vrcp.pop %v561
    %v563 = vmul.f32 1.0, %v562
    %v564 = vtanh.pop %v557
    %566 = vrot.lane.b32.xlu0 %v481, 32
    %v567 = vpop.permute.xlu0 %566
    %v569 = vmul.f32 %v563, %v567
    %571 = vrot.lane.b32.xlu0 %v564, 64
    %v572 = vpop.permute.xlu0 %571
    %v574 = vmul.f32 %v563, %v572
    %576 = vrot.lane.b32.xlu0 %v574, 32
    %v577 = vpop.permute.xlu0 %576
    %v579 = vadd.f32 %v569, %v577
    %v580 = vtanh.pop %v579
    %582 = vrot.lane.b32.xlu0 %v580, 64
    %v583 = vpop.permute.xlu0 %582
    %v585 = vmul.f32 %v563, %v583
    %v586 = vmul.f32 %v585, %v457
    %588 = vrot.lane.b32.xlu0 %v586, 32
    %v589 = vpop.permute.xlu0 %588
    %s591 = scalar_lea.vmem [#allocation11], 2
    %592 = vst.msk [vmem:[%s591] sm:$0x3] %vm340, %v589
    %v593 = vmul.f32 %v585, %v467
    %595 = vrot.lane.b32.xlu0 %v593, 32
    %v596 = vpop.permute.xlu0 %595
    %598 = vst.msk [vmem:[#allocation3] sm:$0x3] %vm340, %v596
    %600 = vrot.lane.b32.xlu0 %v579, 96
    %v601 = vpop.permute.xlu0 %600
    %603 = vst.msk [vmem:[#allocation4] sm:$0x3] %vm340, %v601
    %v604 = vld [vmem:[#allocation3] sm:$0x3]
    %v605 = vld [vmem:[#allocation4] sm:$0x3]
    %s606 = scalar_lea.vmem [#allocation2], 4
    %v607 = vld [vmem:[%s606] sm:$0x3]
    %v609 = vsel %vm352, %v604, 0
    %611 = vmatprep.subr.mxu0 0.0
    %612 = vmatpush1.msra.mxu0 0.0
    %613 = vmatprep.subr.mxu0 0.0
    %614 = vmatpush1.msra.mxu0 0.0
    %615 = vmatprep.subr.mxu0 0.0
    %616 = vmatpush1.msra.mxu0 0.0
    %617 = vmatprep.subr.mxu0 0.0
    %618 = vmatpush1.msra.mxu0 0.0
    %619 = vmatprep.subr.mxu0 0.0
    %620 = vmatpush1.msra.mxu0 0.0
    %621 = vmatprep.subr.mxu0 0.0
    %622 = vmatpush1.msra.mxu0 0.0
    %623 = vmatprep.subr.mxu0 0.0
    %624 = vmatpush1.msra.mxu0 0.0
    %625 = vmatprep.subr.mxu0 0.0
    %626 = vmatpush1.msra.mxu0 0.0
    %627 = vmatprep.subr.mxu0 0.0
    %628 = vmatpush1.msra.mxu0 0.0
    %629 = vmatprep.subr.mxu0 0.0
    %630 = vmatpush1.msra.mxu0 0.0
    %631 = vmatprep.subr.mxu0 0.0
    %632 = vmatpush1.msra.mxu0 0.0
    %633 = vmatprep.subr.mxu0 0.0
    %634 = vmatpush1.msra.mxu0 0.0
    %635 = vmatprep.subr.mxu0 0.0
    %636 = vmatpush1.msra.mxu0 %v346
    %637 = vmatprep.subr.mxu0 0.0
    %638 = vmatpush1.msra.mxu0 %v345
    %639 = vmatprep.subr.mxu0 0.0
    %640 = vmatpush1.msra.mxu0 %v344
    %641 = vmatprep.subr.mxu0 0.0
    %642 = vmatpush1.msra.mxu0 %v343
    %643 = vmatprep.subr.mxu0 0.0
    %644 = vmatpush2.msra.mxu0 0.0
    %645 = vmatprep.subr.mxu0 0.0
    %646 = vmatpush2.msra.mxu0 0.0
    %647 = vmatprep.subr.mxu0 0.0
    %648 = vmatpush2.msra.mxu0 0.0
    %649 = vmatprep.subr.mxu0 0.0
    %650 = vmatpush2.msra.mxu0 0.0
    %651 = vmatprep.subr.mxu0 0.0
    %652 = vmatpush2.msra.mxu0 0.0
    %653 = vmatprep.subr.mxu0 0.0
    %654 = vmatpush2.msra.mxu0 0.0
    %655 = vmatprep.subr.mxu0 0.0
    %656 = vmatpush2.msra.mxu0 0.0
    %657 = vmatprep.subr.mxu0 0.0
    %658 = vmatpush2.msra.mxu0 0.0
    %659 = vmatprep.subr.mxu0 0.0
    %660 = vmatpush2.msra.mxu0 0.0
    %661 = vmatprep.subr.mxu0 0.0
    %662 = vmatpush2.msra.mxu0 0.0
    %663 = vmatprep.subr.mxu0 0.0
    %664 = vmatpush2.msra.mxu0 0.0
    %665 = vmatprep.subr.mxu0 0.0
    %666 = vmatpush2.msra.mxu0 0.0
    %667 = vmatprep.subr.mxu0 0.0
    %668 = vmatpush2.msra.mxu0 0.0
    %669 = vmatprep.subr.mxu0 0.0
    %670 = vmatpush2.msra.mxu0 0.0
    %671 = vmatprep.subr.mxu0 0.0
    %672 = vmatpush2.msra.mxu0 0.0
    %673 = vmatprep.subr.mxu0 0.0
    %674 = vmatpush2.msra.mxu0 0.0
    %675 = vmatprep.mubr.f32.mxu0 0.0
    %676 = vmatmul.mubr.f32.gmra.mxu0 %v609
    %v677 = vpop.f32.mrf.mxu0
    %v678 = vadd.f32 0.0, %v677
    %v679 = vpop.f32.mrf.mxu0
    %680 = vdwg.mxu0
    %v681 = vadd.f32 %v607, %v678
    %v682 = vxor.u32 %v681, 2147483648
    %v683 = vmul.f32 %v682, 1.442695
    %v684 = vpow.pop %v683
    %v685 = vadd.f32 %v684, 1.0
    %v686 = vrcp.pop %v685
    %v687 = vmul.f32 1.0, %v686
    %v688 = vtanh.pop %v681
    %690 = vrot.lane.b32.xlu0 %v605, 32
    %v691 = vpop.permute.xlu0 %690
    %v693 = vmul.f32 %v687, %v691
    %695 = vrot.lane.b32.xlu0 %v688, 64
    %v696 = vpop.permute.xlu0 %695
    %v698 = vmul.f32 %v687, %v696
    %700 = vrot.lane.b32.xlu0 %v698, 32
    %v701 = vpop.permute.xlu0 %700
    %v703 = vadd.f32 %v693, %v701
    %v704 = vtanh.pop %v703
    %706 = vrot.lane.b32.xlu0 %v704, 64
    %v707 = vpop.permute.xlu0 %706
    %v709 = vmul.f32 %v687, %v707
    %v710 = vmul.f32 %v709, %v457
    %712 = vrot.lane.b32.xlu0 %v710, 32
    %v713 = vpop.permute.xlu0 %712
    %s715 = scalar_lea.vmem [#allocation11], 4
    %716 = vst.msk [vmem:[%s715] sm:$0x3] %vm340, %v713
    %v717 = vmul.f32 %v709, %v467
    %719 = vrot.lane.b32.xlu0 %v717, 32
    %v720 = vpop.permute.xlu0 %719
    %722 = vst.msk [vmem:[#allocation3] sm:$0x3] %vm340, %v720
    %724 = vrot.lane.b32.xlu0 %v703, 96
    %v725 = vpop.permute.xlu0 %724
    %727 = vst.msk [vmem:[#allocation4] sm:$0x3] %vm340, %v725
    %v728 = vld [vmem:[#allocation3] sm:$0x3]
    %v729 = vld [vmem:[#allocation4] sm:$0x3]
    %s730 = scalar_lea.vmem [#allocation2], 6
    %v731 = vld [vmem:[%s730] sm:$0x3]
    %v733 = vsel %vm352, %v728, 0
    %735 = vmatprep.subr.mxu0 0.0
    %736 = vmatpush1.msra.mxu0 0.0
    %737 = vmatprep.subr.mxu0 0.0
    %738 = vmatpush1.msra.mxu0 0.0
    %739 = vmatprep.subr.mxu0 0.0
    %740 = vmatpush1.msra.mxu0 0.0
    %741 = vmatprep.subr.mxu0 0.0
    %742 = vmatpush1.msra.mxu0 0.0
    %743 = vmatprep.subr.mxu0 0.0
    %744 = vmatpush1.msra.mxu0 0.0
    %745 = vmatprep.subr.mxu0 0.0
    %746 = vmatpush1.msra.mxu0 0.0
    %747 = vmatprep.subr.mxu0 0.0
    %748 = vmatpush1.msra.mxu0 0.0
    %749 = vmatprep.subr.mxu0 0.0
    %750 = vmatpush1.msra.mxu0 0.0
    %751 = vmatprep.subr.mxu0 0.0
    %752 = vmatpush1.msra.mxu0 0.0
    %753 = vmatprep.subr.mxu0 0.0
    %754 = vmatpush1.msra.mxu0 0.0
    %755 = vmatprep.subr.mxu0 0.0
    %756 = vmatpush1.msra.mxu0 0.0
    %757 = vmatprep.subr.mxu0 0.0
    %758 = vmatpush1.msra.mxu0 0.0
    %759 = vmatprep.subr.mxu0 0.0
    %760 = vmatpush1.msra.mxu0 %v346
    %761 = vmatprep.subr.mxu0 0.0
    %762 = vmatpush1.msra.mxu0 %v345
    %763 = vmatprep.subr.mxu0 0.0
    %764 = vmatpush1.msra.mxu0 %v344
    %765 = vmatprep.subr.mxu0 0.0
    %766 = vmatpush1.msra.mxu0 %v343
    %767 = vmatprep.subr.mxu0 0.0
    %768 = vmatpush2.msra.mxu0 0.0
    %769 = vmatprep.subr.mxu0 0.0
    %770 = vmatpush2.msra.mxu0 0.0
    %771 = vmatprep.subr.mxu0 0.0
    %772 = vmatpush2.msra.mxu0 0.0
    %773 = vmatprep.subr.mxu0 0.0
    %774 = vmatpush2.msra.mxu0 0.0
    %775 = vmatprep.subr.mxu0 0.0
    %776 = vmatpush2.msra.mxu0 0.0
    %777 = vmatprep.subr.mxu0 0.0
    %778 = vmatpush2.msra.mxu0 0.0
    %779 = vmatprep.subr.mxu0 0.0
    %780 = vmatpush2.msra.mxu0 0.0
    %781 = vmatprep.subr.mxu0 0.0
    %782 = vmatpush2.msra.mxu0 0.0
    %783 = vmatprep.subr.mxu0 0.0
    %784 = vmatpush2.msra.mxu0 0.0
    %785 = vmatprep.subr.mxu0 0.0
    %786 = vmatpush2.msra.mxu0 0.0
    %787 = vmatprep.subr.mxu0 0.0
    %788 = vmatpush2.msra.mxu0 0.0
    %789 = vmatprep.subr.mxu0 0.0
    %790 = vmatpush2.msra.mxu0 0.0
    %791 = vmatprep.subr.mxu0 0.0
    %792 = vmatpush2.msra.mxu0 0.0
    %793 = vmatprep.subr.mxu0 0.0
    %794 = vmatpush2.msra.mxu0 0.0
    %795 = vmatprep.subr.mxu0 0.0
    %796 = vmatpush2.msra.mxu0 0.0
    %797 = vmatprep.subr.mxu0 0.0
    %798 = vmatpush2.msra.mxu0 0.0
    %799 = vmatprep.mubr.f32.mxu0 0.0
    %800 = vmatmul.mubr.f32.gmra.mxu0 %v733
    %v801 = vpop.f32.mrf.mxu0
    %v802 = vadd.f32 0.0, %v801
    %v803 = vpop.f32.mrf.mxu0
    %804 = vdwg.mxu0
    %v805 = vadd.f32 %v731, %v802
    %v806 = vxor.u32 %v805, 2147483648
    %v807 = vmul.f32 %v806, 1.442695
    %v808 = vpow.pop %v807
    %v809 = vadd.f32 %v808, 1.0
    %v810 = vrcp.pop %v809
    %v811 = vmul.f32 1.0, %v810
    %v812 = vtanh.pop %v805
    %814 = vrot.lane.b32.xlu0 %v729, 32
    %v815 = vpop.permute.xlu0 %814
    %v817 = vmul.f32 %v811, %v815
    %819 = vrot.lane.b32.xlu0 %v812, 64
    %v820 = vpop.permute.xlu0 %819
    %v822 = vmul.f32 %v811, %v820
    %824 = vrot.lane.b32.xlu0 %v822, 32
    %v825 = vpop.permute.xlu0 %824
    %v827 = vadd.f32 %v817, %v825
    %v828 = vtanh.pop %v827
    %830 = vrot.lane.b32.xlu0 %v828, 64
    %v831 = vpop.permute.xlu0 %830
    %v833 = vmul.f32 %v811, %v831
    %v834 = vmul.f32 %v833, %v457
    %836 = vrot.lane.b32.xlu0 %v834, 32
    %v837 = vpop.permute.xlu0 %836
    %s839 = scalar_lea.vmem [#allocation11], 6
    %840 = vst.msk [vmem:[%s839] sm:$0x3] %vm340, %v837
    %v841 = vmul.f32 %v833, %v467
    %843 = vrot.lane.b32.xlu0 %v841, 32
    %v844 = vpop.permute.xlu0 %843
    %846 = vst.msk [vmem:[#allocation3] sm:$0x3] %vm340, %v844
    %848 = vrot.lane.b32.xlu0 %v827, 96
    %v849 = vpop.permute.xlu0 %848
    %851 = vst.msk [vmem:[#allocation4] sm:$0x3] %vm340, %v849
    %v852 = vld [vmem:[#allocation3] sm:$0x3]
    %v853 = vld [vmem:[#allocation4] sm:$0x3]
    %s854 = scalar_lea.vmem [#allocation2], 8
    %v855 = vld [vmem:[%s854] sm:$0x3]
    %v857 = vsel %vm352, %v852, 0
    %859 = vmatprep.subr.mxu0 0.0
    %860 = vmatpush1.msra.mxu0 0.0
    %861 = vmatprep.subr.mxu0 0.0
    %862 = vmatpush1.msra.mxu0 0.0
    %863 = vmatprep.subr.mxu0 0.0
    %864 = vmatpush1.msra.mxu0 0.0
    %865 = vmatprep.subr.mxu0 0.0
    %866 = vmatpush1.msra.mxu0 0.0
    %867 = vmatprep.subr.mxu0 0.0
    %868 = vmatpush1.msra.mxu0 0.0
    %869 = vmatprep.subr.mxu0 0.0
    %870 = vmatpush1.msra.mxu0 0.0
    %871 = vmatprep.subr.mxu0 0.0
    %872 = vmatpush1.msra.mxu0 0.0
    %873 = vmatprep.subr.mxu0 0.0
    %874 = vmatpush1.msra.mxu0 0.0
    %875 = vmatprep.subr.mxu0 0.0
    %876 = vmatpush1.msra.mxu0 0.0
    %877 = vmatprep.subr.mxu0 0.0
    %878 = vmatpush1.msra.mxu0 0.0
    %879 = vmatprep.subr.mxu0 0.0
    %880 = vmatpush1.msra.mxu0 0.0
    %881 = vmatprep.subr.mxu0 0.0
    %882 = vmatpush1.msra.mxu0 0.0
    %883 = vmatprep.subr.mxu0 0.0
    %884 = vmatpush1.msra.mxu0 %v346
    %885 = vmatprep.subr.mxu0 0.0
    %886 = vmatpush1.msra.mxu0 %v345
    %887 = vmatprep.subr.mxu0 0.0
    %888 = vmatpush1.msra.mxu0 %v344
    %889 = vmatprep.subr.mxu0 0.0
    %890 = vmatpush1.msra.mxu0 %v343
    %891 = vmatprep.subr.mxu0 0.0
    %892 = vmatpush2.msra.mxu0 0.0
    %893 = vmatprep.subr.mxu0 0.0
    %894 = vmatpush2.msra.mxu0 0.0
    %895 = vmatprep.subr.mxu0 0.0
    %896 = vmatpush2.msra.mxu0 0.0
    %897 = vmatprep.subr.mxu0 0.0
    %898 = vmatpush2.msra.mxu0 0.0
    %899 = vmatprep.subr.mxu0 0.0
    %900 = vmatpush2.msra.mxu0 0.0
    %901 = vmatprep.subr.mxu0 0.0
    %902 = vmatpush2.msra.mxu0 0.0
    %903 = vmatprep.subr.mxu0 0.0
    %904 = vmatpush2.msra.mxu0 0.0
    %905 = vmatprep.subr.mxu0 0.0
    %906 = vmatpush2.msra.mxu0 0.0
    %907 = vmatprep.subr.mxu0 0.0
    %908 = vmatpush2.msra.mxu0 0.0
    %909 = vmatprep.subr.mxu0 0.0
    %910 = vmatpush2.msra.mxu0 0.0
    %911 = vmatprep.subr.mxu0 0.0
    %912 = vmatpush2.msra.mxu0 0.0
    %913 = vmatprep.subr.mxu0 0.0
    %914 = vmatpush2.msra.mxu0 0.0
    %915 = vmatprep.subr.mxu0 0.0
    %916 = vmatpush2.msra.mxu0 0.0
    %917 = vmatprep.subr.mxu0 0.0
    %918 = vmatpush2.msra.mxu0 0.0
    %919 = vmatprep.subr.mxu0 0.0
    %920 = vmatpush2.msra.mxu0 0.0
    %921 = vmatprep.subr.mxu0 0.0
    %922 = vmatpush2.msra.mxu0 0.0
    %923 = vmatprep.mubr.f32.mxu0 0.0
    %924 = vmatmul.mubr.f32.gmra.mxu0 %v857
    %v925 = vpop.f32.mrf.mxu0
    %v926 = vadd.f32 0.0, %v925
    %v927 = vpop.f32.mrf.mxu0
    %928 = vdwg.mxu0
    %v929 = vadd.f32 %v855, %v926
    %v930 = vxor.u32 %v929, 2147483648
    %v931 = vmul.f32 %v930, 1.442695
    %v932 = vpow.pop %v931
    %v933 = vadd.f32 %v932, 1.0
    %v934 = vrcp.pop %v933
    %v935 = vmul.f32 1.0, %v934
    %v936 = vtanh.pop %v929
    %938 = vrot.lane.b32.xlu0 %v853, 32
    %v939 = vpop.permute.xlu0 %938
    %v941 = vmul.f32 %v935, %v939
    %943 = vrot.lane.b32.xlu0 %v936, 64
    %v944 = vpop.permute.xlu0 %943
    %v946 = vmul.f32 %v935, %v944
    %948 = vrot.lane.b32.xlu0 %v946, 32
    %v949 = vpop.permute.xlu0 %948
    %v951 = vadd.f32 %v941, %v949
    %v952 = vtanh.pop %v951
    %954 = vrot.lane.b32.xlu0 %v952, 64
    %v955 = vpop.permute.xlu0 %954
    %v957 = vmul.f32 %v935, %v955
    %v958 = vmul.f32 %v957, %v457
    %960 = vrot.lane.b32.xlu0 %v958, 32
    %v961 = vpop.permute.xlu0 %960
    %s963 = scalar_lea.vmem [#allocation11], 8
    %964 = vst.msk [vmem:[%s963] sm:$0x3] %vm340, %v961
    %v965 = vmul.f32 %v957, %v467
    %967 = vrot.lane.b32.xlu0 %v965, 32
    %v968 = vpop.permute.xlu0 %967
    %970 = vst.msk [vmem:[#allocation3] sm:$0x3] %vm340, %v968
    %972 = vrot.lane.b32.xlu0 %v951, 96
    %v973 = vpop.permute.xlu0 %972
    %975 = vst.msk [vmem:[#allocation4] sm:$0x3] %vm340, %v973
    %v976 = vld [vmem:[#allocation3] sm:$0x3]
    %v977 = vld [vmem:[#allocation4] sm:$0x3]
    %s978 = scalar_lea.vmem [#allocation2], 10
    %v979 = vld [vmem:[%s978] sm:$0x3]
    %v981 = vsel %vm352, %v976, 0
    %983 = vmatprep.subr.mxu0 0.0
    %984 = vmatpush1.msra.mxu0 0.0
    %985 = vmatprep.subr.mxu0 0.0
    %986 = vmatpush1.msra.mxu0 0.0
    %987 = vmatprep.subr.mxu0 0.0
    %988 = vmatpush1.msra.mxu0 0.0
    %989 = vmatprep.subr.mxu0 0.0
    %990 = vmatpush1.msra.mxu0 0.0
    %991 = vmatprep.subr.mxu0 0.0
    %992 = vmatpush1.msra.mxu0 0.0
    %993 = vmatprep.subr.mxu0 0.0
    %994 = vmatpush1.msra.mxu0 0.0
    %995 = vmatprep.subr.mxu0 0.0
    %996 = vmatpush1.msra.mxu0 0.0
    %997 = vmatprep.subr.mxu0 0.0
    %998 = vmatpush1.msra.mxu0 0.0
    %999 = vmatprep.subr.mxu0 0.0
    %1000 = vmatpush1.msra.mxu0 0.0
    %1001 = vmatprep.subr.mxu0 0.0
    %1002 = vmatpush1.msra.mxu0 0.0
    %1003 = vmatprep.subr.mxu0 0.0
    %1004 = vmatpush1.msra.mxu0 0.0
    %1005 = vmatprep.subr.mxu0 0.0
    %1006 = vmatpush1.msra.mxu0 0.0
    %1007 = vmatprep.subr.mxu0 0.0
    %1008 = vmatpush1.msra.mxu0 %v346
    %1009 = vmatprep.subr.mxu0 0.0
    %1010 = vmatpush1.msra.mxu0 %v345
    %1011 = vmatprep.subr.mxu0 0.0
    %1012 = vmatpush1.msra.mxu0 %v344
    %1013 = vmatprep.subr.mxu0 0.0
    %1014 = vmatpush1.msra.mxu0 %v343
    %1015 = vmatprep.subr.mxu0 0.0
    %1016 = vmatpush2.msra.mxu0 0.0
    %1017 = vmatprep.subr.mxu0 0.0
    %1018 = vmatpush2.msra.mxu0 0.0
    %1019 = vmatprep.subr.mxu0 0.0
    %1020 = vmatpush2.msra.mxu0 0.0
    %1021 = vmatprep.subr.mxu0 0.0
    %1022 = vmatpush2.msra.mxu0 0.0
    %1023 = vmatprep.subr.mxu0 0.0
    %1024 = vmatpush2.msra.mxu0 0.0
    %1025 = vmatprep.subr.mxu0 0.0
    %1026 = vmatpush2.msra.mxu0 0.0
    %1027 = vmatprep.subr.mxu0 0.0
    %1028 = vmatpush2.msra.mxu0 0.0
    %1029 = vmatprep.subr.mxu0 0.0
    %1030 = vmatpush2.msra.mxu0 0.0
    %1031 = vmatprep.subr.mxu0 0.0
    %1032 = vmatpush2.msra.mxu0 0.0
    %1033 = vmatprep.subr.mxu0 0.0
    %1034 = vmatpush2.msra.mxu0 0.0
    %1035 = vmatprep.subr.mxu0 0.0
    %1036 = vmatpush2.msra.mxu0 0.0
    %1037 = vmatprep.subr.mxu0 0.0
    %1038 = vmatpush2.msra.mxu0 0.0
    %1039 = vmatprep.subr.mxu0 0.0
    %1040 = vmatpush2.msra.mxu0 0.0
    %1041 = vmatprep.subr.mxu0 0.0
    %1042 = vmatpush2.msra.mxu0 0.0
    %1043 = vmatprep.subr.mxu0 0.0
    %1044 = vmatpush2.msra.mxu0 0.0
    %1045 = vmatprep.subr.mxu0 0.0
    %1046 = vmatpush2.msra.mxu0 0.0
    %1047 = vmatprep.mubr.f32.mxu0 0.0
    %1048 = vmatmul.mubr.f32.gmra.mxu0 %v981
    %v1049 = vpop.f32.mrf.mxu0
    %v1050 = vadd.f32 0.0, %v1049
    %v1051 = vpop.f32.mrf.mxu0
    %1052 = vdwg.mxu0
    %v1053 = vadd.f32 %v979, %v1050
    %v1054 = vxor.u32 %v1053, 2147483648
    %v1055 = vmul.f32 %v1054, 1.442695
    %v1056 = vpow.pop %v1055
    %v1057 = vadd.f32 %v1056, 1.0
    %v1058 = vrcp.pop %v1057
    %v1059 = vmul.f32 1.0, %v1058
    %v1060 = vtanh.pop %v1053
    %1062 = vrot.lane.b32.xlu0 %v977, 32
    %v1063 = vpop.permute.xlu0 %1062
    %v1065 = vmul.f32 %v1059, %v1063
    %1067 = vrot.lane.b32.xlu0 %v1060, 64
    %v1068 = vpop.permute.xlu0 %1067
    %v1070 = vmul.f32 %v1059, %v1068
    %1072 = vrot.lane.b32.xlu0 %v1070, 32
    %v1073 = vpop.permute.xlu0 %1072
    %v1075 = vadd.f32 %v1065, %v1073
    %v1076 = vtanh.pop %v1075
    %1078 = vrot.lane.b32.xlu0 %v1076, 64
    %v1079 = vpop.permute.xlu0 %1078
    %v1081 = vmul.f32 %v1059, %v1079
    %v1082 = vmul.f32 %v1081, %v457
    %1084 = vrot.lane.b32.xlu0 %v1082, 32
    %v1085 = vpop.permute.xlu0 %1084
    %s1087 = scalar_lea.vmem [#allocation11], 10
    %1088 = vst.msk [vmem:[%s1087] sm:$0x3] %vm340, %v1085
    %v1089 = vmul.f32 %v1081, %v467
    %1091 = vrot.lane.b32.xlu0 %v1089, 32
    %v1092 = vpop.permute.xlu0 %1091
    %1094 = vst.msk [vmem:[#allocation3] sm:$0x3] %vm340, %v1092
    %1096 = vrot.lane.b32.xlu0 %v1075, 96
    %v1097 = vpop.permute.xlu0 %1096
    %1099 = vst.msk [vmem:[#allocation4] sm:$0x3] %vm340, %v1097
    %v1100 = vld [vmem:[#allocation3] sm:$0x3]
    %v1101 = vld [vmem:[#allocation4] sm:$0x3]
    %s1102 = scalar_lea.vmem [#allocation2], 12
    %v1103 = vld [vmem:[%s1102] sm:$0x3]
    %v1105 = vsel %vm352, %v1100, 0
    %1107 = vmatprep.subr.mxu0 0.0
    %1108 = vmatpush1.msra.mxu0 0.0
    %1109 = vmatprep.subr.mxu0 0.0
    %1110 = vmatpush1.msra.mxu0 0.0
    %1111 = vmatprep.subr.mxu0 0.0
    %1112 = vmatpush1.msra.mxu0 0.0
    %1113 = vmatprep.subr.mxu0 0.0
    %1114 = vmatpush1.msra.mxu0 0.0
    %1115 = vmatprep.subr.mxu0 0.0
    %1116 = vmatpush1.msra.mxu0 0.0
    %1117 = vmatprep.subr.mxu0 0.0
    %1118 = vmatpush1.msra.mxu0 0.0
    %1119 = vmatprep.subr.mxu0 0.0
    %1120 = vmatpush1.msra.mxu0 0.0
    %1121 = vmatprep.subr.mxu0 0.0
    %1122 = vmatpush1.msra.mxu0 0.0
    %1123 = vmatprep.subr.mxu0 0.0
    %1124 = vmatpush1.msra.mxu0 0.0
    %1125 = vmatprep.subr.mxu0 0.0
    %1126 = vmatpush1.msra.mxu0 0.0
    %1127 = vmatprep.subr.mxu0 0.0
    %1128 = vmatpush1.msra.mxu0 0.0
    %1129 = vmatprep.subr.mxu0 0.0
    %1130 = vmatpush1.msra.mxu0 0.0
    %1131 = vmatprep.subr.mxu0 0.0
    %1132 = vmatpush1.msra.mxu0 %v346
    %1133 = vmatprep.subr.mxu0 0.0
    %1134 = vmatpush1.msra.mxu0 %v345
    %1135 = vmatprep.subr.mxu0 0.0
    %1136 = vmatpush1.msra.mxu0 %v344
    %1137 = vmatprep.subr.mxu0 0.0
    %1138 = vmatpush1.msra.mxu0 %v343
    %1139 = vmatprep.subr.mxu0 0.0
    %1140 = vmatpush2.msra.mxu0 0.0
    %1141 = vmatprep.subr.mxu0 0.0
    %1142 = vmatpush2.msra.mxu0 0.0
    %1143 = vmatprep.subr.mxu0 0.0
    %1144 = vmatpush2.msra.mxu0 0.0
    %1145 = vmatprep.subr.mxu0 0.0
    %1146 = vmatpush2.msra.mxu0 0.0
    %1147 = vmatprep.subr.mxu0 0.0
    %1148 = vmatpush2.msra.mxu0 0.0
    %1149 = vmatprep.subr.mxu0 0.0
    %1150 = vmatpush2.msra.mxu0 0.0
    %1151 = vmatprep.subr.mxu0 0.0
    %1152 = vmatpush2.msra.mxu0 0.0
    %1153 = vmatprep.subr.mxu0 0.0
    %1154 = vmatpush2.msra.mxu0 0.0
    %1155 = vmatprep.subr.mxu0 0.0
    %1156 = vmatpush2.msra.mxu0 0.0
    %1157 = vmatprep.subr.mxu0 0.0
    %1158 = vmatpush2.msra.mxu0 0.0
    %1159 = vmatprep.subr.mxu0 0.0
    %1160 = vmatpush2.msra.mxu0 0.0
    %1161 = vmatprep.subr.mxu0 0.0
    %1162 = vmatpush2.msra.mxu0 0.0
    %1163 = vmatprep.subr.mxu0 0.0
    %1164 = vmatpush2.msra.mxu0 0.0
    %1165 = vmatprep.subr.mxu0 0.0
    %1166 = vmatpush2.msra.mxu0 0.0
    %1167 = vmatprep.subr.mxu0 0.0
    %1168 = vmatpush2.msra.mxu0 0.0
    %1169 = vmatprep.subr.mxu0 0.0
    %1170 = vmatpush2.msra.mxu0 0.0
    %1171 = vmatprep.mubr.f32.mxu0 0.0
    %1172 = vmatmul.mubr.f32.gmra.mxu0 %v1105
    %v1173 = vpop.f32.mrf.mxu0
    %v1174 = vadd.f32 0.0, %v1173
    %v1175 = vpop.f32.mrf.mxu0
    %1176 = vdwg.mxu0
    %v1177 = vadd.f32 %v1103, %v1174
    %v1178 = vxor.u32 %v1177, 2147483648
    %v1179 = vmul.f32 %v1178, 1.442695
    %v1180 = vpow.pop %v1179
    %v1181 = vadd.f32 %v1180, 1.0
    %v1182 = vrcp.pop %v1181
    %v1183 = vmul.f32 1.0, %v1182
    %v1184 = vtanh.pop %v1177
    %1186 = vrot.lane.b32.xlu0 %v1101, 32
    %v1187 = vpop.permute.xlu0 %1186
    %v1189 = vmul.f32 %v1183, %v1187
    %1191 = vrot.lane.b32.xlu0 %v1184, 64
    %v1192 = vpop.permute.xlu0 %1191
    %v1194 = vmul.f32 %v1183, %v1192
    %1196 = vrot.lane.b32.xlu0 %v1194, 32
    %v1197 = vpop.permute.xlu0 %1196
    %v1199 = vadd.f32 %v1189, %v1197
    %v1200 = vtanh.pop %v1199
    %1202 = vrot.lane.b32.xlu0 %v1200, 64
    %v1203 = vpop.permute.xlu0 %1202
    %v1205 = vmul.f32 %v1183, %v1203
    %v1206 = vmul.f32 %v1205, %v457
    %1208 = vrot.lane.b32.xlu0 %v1206, 32
    %v1209 = vpop.permute.xlu0 %1208
    %s1211 = scalar_lea.vmem [#allocation11], 12
    %1212 = vst.msk [vmem:[%s1211] sm:$0x3] %vm340, %v1209
    %v1213 = vmul.f32 %v1205, %v467
    %1215 = vrot.lane.b32.xlu0 %v1213, 32
    %v1216 = vpop.permute.xlu0 %1215
    %1218 = vst.msk [vmem:[#allocation3] sm:$0x3] %vm340, %v1216
    %1220 = vrot.lane.b32.xlu0 %v1199, 96
    %v1221 = vpop.permute.xlu0 %1220
    %1223 = vst.msk [vmem:[#allocation4] sm:$0x3] %vm340, %v1221
    %v1224 = vld [vmem:[#allocation3] sm:$0x3]
    %v1225 = vld [vmem:[#allocation4] sm:$0x3]
    %s1226 = scalar_lea.vmem [#allocation2], 14
    %v1227 = vld [vmem:[%s1226] sm:$0x3]
    %v1229 = vsel %vm352, %v1224, 0
    %1231 = vmatprep.subr.mxu0 0.0
    %1232 = vmatpush1.msra.mxu0 0.0
    %1233 = vmatprep.subr.mxu0 0.0
    %1234 = vmatpush1.msra.mxu0 0.0
    %1235 = vmatprep.subr.mxu0 0.0
    %1236 = vmatpush1.msra.mxu0 0.0
    %1237 = vmatprep.subr.mxu0 0.0
    %1238 = vmatpush1.msra.mxu0 0.0
    %1239 = vmatprep.subr.mxu0 0.0
    %1240 = vmatpush1.msra.mxu0 0.0
    %1241 = vmatprep.subr.mxu0 0.0
    %1242 = vmatpush1.msra.mxu0 0.0
    %1243 = vmatprep.subr.mxu0 0.0
    %1244 = vmatpush1.msra.mxu0 0.0
    %1245 = vmatprep.subr.mxu0 0.0
    %1246 = vmatpush1.msra.mxu0 0.0
    %1247 = vmatprep.subr.mxu0 0.0
    %1248 = vmatpush1.msra.mxu0 0.0
    %1249 = vmatprep.subr.mxu0 0.0
    %1250 = vmatpush1.msra.mxu0 0.0
    %1251 = vmatprep.subr.mxu0 0.0
    %1252 = vmatpush1.msra.mxu0 0.0
    %1253 = vmatprep.subr.mxu0 0.0
    %1254 = vmatpush1.msra.mxu0 0.0
    %1255 = vmatprep.subr.mxu0 0.0
    %1256 = vmatpush1.msra.mxu0 %v346
    %1257 = vmatprep.subr.mxu0 0.0
    %1258 = vmatpush1.msra.mxu0 %v345
    %1259 = vmatprep.subr.mxu0 0.0
    %1260 = vmatpush1.msra.mxu0 %v344
    %1261 = vmatprep.subr.mxu0 0.0
    %1262 = vmatpush1.msra.mxu0 %v343
    %1263 = vmatprep.subr.mxu0 0.0
    %1264 = vmatpush2.msra.mxu0 0.0
    %1265 = vmatprep.subr.mxu0 0.0
    %1266 = vmatpush2.msra.mxu0 0.0
    %1267 = vmatprep.subr.mxu0 0.0
    %1268 = vmatpush2.msra.mxu0 0.0
    %1269 = vmatprep.subr.mxu0 0.0
    %1270 = vmatpush2.msra.mxu0 0.0
    %1271 = vmatprep.subr.mxu0 0.0
    %1272 = vmatpush2.msra.mxu0 0.0
    %1273 = vmatprep.subr.mxu0 0.0
    %1274 = vmatpush2.msra.mxu0 0.0
    %1275 = vmatprep.subr.mxu0 0.0
    %1276 = vmatpush2.msra.mxu0 0.0
    %1277 = vmatprep.subr.mxu0 0.0
    %1278 = vmatpush2.msra.mxu0 0.0
    %1279 = vmatprep.subr.mxu0 0.0
    %1280 = vmatpush2.msra.mxu0 0.0
    %1281 = vmatprep.subr.mxu0 0.0
    %1282 = vmatpush2.msra.mxu0 0.0
    %1283 = vmatprep.subr.mxu0 0.0
    %1284 = vmatpush2.msra.mxu0 0.0
    %1285 = vmatprep.subr.mxu0 0.0
    %1286 = vmatpush2.msra.mxu0 0.0
    %1287 = vmatprep.subr.mxu0 0.0
    %1288 = vmatpush2.msra.mxu0 0.0
    %1289 = vmatprep.subr.mxu0 0.0
    %1290 = vmatpush2.msra.mxu0 0.0
    %1291 = vmatprep.subr.mxu0 0.0
    %1292 = vmatpush2.msra.mxu0 0.0
    %1293 = vmatprep.subr.mxu0 0.0
    %1294 = vmatpush2.msra.mxu0 0.0
    %1295 = vmatprep.mubr.f32.mxu0 0.0
    %1296 = vmatmul.mubr.f32.gmra.mxu0 %v1229
    %v1297 = vpop.f32.mrf.mxu0
    %v1298 = vadd.f32 0.0, %v1297
    %v1299 = vpop.f32.mrf.mxu0
    %1300 = vdwg.mxu0
    %v1301 = vadd.f32 %v1227, %v1298
    %v1302 = vxor.u32 %v1301, 2147483648
    %v1303 = vmul.f32 %v1302, 1.442695
    %v1304 = vpow.pop %v1303
    %v1305 = vadd.f32 %v1304, 1.0
    %v1306 = vrcp.pop %v1305
    %v1307 = vmul.f32 1.0, %v1306
    %v1308 = vtanh.pop %v1301
    %1310 = vrot.lane.b32.xlu0 %v1225, 32
    %v1311 = vpop.permute.xlu0 %1310
    %v1313 = vmul.f32 %v1307, %v1311
    %1315 = vrot.lane.b32.xlu0 %v1308, 64
    %v1316 = vpop.permute.xlu0 %1315
    %v1318 = vmul.f32 %v1307, %v1316
    %1320 = vrot.lane.b32.xlu0 %v1318, 32
    %v1321 = vpop.permute.xlu0 %1320
    %v1323 = vadd.f32 %v1313, %v1321
    %v1324 = vtanh.pop %v1323
    %1326 = vrot.lane.b32.xlu0 %v1324, 64
    %v1327 = vpop.permute.xlu0 %1326
    %v1329 = vmul.f32 %v1307, %v1327
    %v1330 = vmul.f32 %v1329, %v457
    %1332 = vrot.lane.b32.xlu0 %v1330, 32
    %v1333 = vpop.permute.xlu0 %1332
    %s1335 = scalar_lea.vmem [#allocation11], 14
    %1336 = vst.msk [vmem:[%s1335] sm:$0x3] %vm340, %v1333
    %v1337 = vmul.f32 %v1329, %v467
    %1339 = vrot.lane.b32.xlu0 %v1337, 32
    %v1340 = vpop.permute.xlu0 %1339
    %1342 = vst.msk [vmem:[#allocation3] sm:$0x3] %vm340, %v1340
    %1344 = vrot.lane.b32.xlu0 %v1323, 96
    %v1345 = vpop.permute.xlu0 %1344
    %1347 = vst.msk [vmem:[#allocation4] sm:$0x3] %vm340, %v1345
    %v1348 = vld [vmem:[#allocation3] sm:$0x3]
    %1349 = vst.msk [vmem:[#allocation12] sm:$0x3] %vm340, %v1348
    %v1350 = vld [vmem:[#allocation4] sm:$0x3]
    %1351 = vst.msk [vmem:[#allocation14] sm:$0x3] %vm340, %v1350
    // Predicated region
    $region42: #{tpu_custom_call.1} parent=1 // pred_check
      _
    $region43: #{tpu_custom_call.1} parent=1 // pred_check_branch
      %1353 = sbr.rel (0) target = $region45
    $region44: #{tpu_custom_call.1} parent=1 // pred_region
      %s1355 = ssub.s32 256, 256
      %1356 = vsyncadd [#allocation7], %s1355
      %s1357 = sshll.u32 [#allocation11], 4
      %s1358 = int_to_ptr.vmem [resolvable:$true] %s1357
      %1363 = dma.vmem_to_hbm [thread:$0]  %s1358, 256, %s7, [#allocation7], 32, 32, 2
    $region45: #{tpu_custom_call.1} parent=1 // pred_fallthru
      _
    // Predicated region
    $region46: #{tpu_custom_call.1} parent=1 // pred_check
      _
    $region47: #{tpu_custom_call.1} parent=1 // pred_check_branch
      %1365 = sbr.rel (0) target = $region49
    $region48: #{tpu_custom_call.1} parent=1 // pred_region
      %s1367 = ssub.s32 32, 32
      %1368 = vsyncadd [#allocation13], %s1367
      %s1370 = sshll.u32 [#allocation12], 4
      %s1371 = int_to_ptr.vmem [resolvable:$true] %s1370
      %1373 = dma.vmem_to_hbm [thread:$0]  %s1371, 32, %s8, [#allocation13]
    $region49: #{tpu_custom_call.1} parent=1 // pred_fallthru
      _
    // Predicated region
    $region50: #{tpu_custom_call.1} parent=1 // pred_check
      _
    $region51: #{tpu_custom_call.1} parent=1 // pred_check_branch
      %1375 = sbr.rel (0) target = $region53
    $region52: #{tpu_custom_call.1} parent=1 // pred_region
      %s1377 = ssub.s32 32, 32
      %1378 = vsyncadd [#allocation13], %s1377
      %s1380 = sshll.u32 [#allocation14], 4
      %s1381 = int_to_ptr.vmem [resolvable:$true] %s1380
      %1383 = dma.vmem_to_hbm [thread:$0]  %s1381, 32, %s9, [#allocation13]
    $region53: #{tpu_custom_call.1} parent=1 // pred_fallthru
      _
    // Predicated region
    $region54: #{tpu_custom_call.1} parent=1 // pred_check
      _
    $region55: #{tpu_custom_call.1} parent=1 // pred_check_branch
      %1385 = sbr.rel (0) target = $region57
    $region56: #{tpu_custom_call.1} parent=1 // pred_region
      %1386 = dma.done [#allocation7], 256
    $region57: #{tpu_custom_call.1} parent=1 // pred_fallthru
      _
    // Predicated region
    $region58: #{tpu_custom_call.1} parent=1 // pred_check
      _
    $region59: #{tpu_custom_call.1} parent=1 // pred_check_branch
      %1388 = sbr.rel (0) target = $region61
    $region60: #{tpu_custom_call.1} parent=1 // pred_region
      %1389 = dma.done [#allocation13], 32
    $region61: #{tpu_custom_call.1} parent=1 // pred_fallthru
      _
    // Predicated region
    $region62: #{tpu_custom_call.1} parent=1 // pred_check
      _
    $region63: #{tpu_custom_call.1} parent=1 // pred_check_branch
      %1391 = sbr.rel (0) target = $region65
    $region64: #{tpu_custom_call.1} parent=1 // pred_region
      %1392 = dma.done [#allocation13], 32
    $region65: #{tpu_custom_call.1} parent=1 // pred_fallthru
      _
    %1393 = vsyncpa [#allocation6], 1
    %1394 = vsyncpa [#allocation9], 1
    %1395 = vsyncpa [#allocation7], 1
    %1396 = vsyncpa [#allocation13], 1

</llo_original>
